<compile_context>
chip_gen: v6e
topology: v6e:2x2x1
jax: 0.10.0
libtpu: 0.0.40
codegen_flags: <defaults>
</compile_context>

<pallas_src>
import math
import functools

import jax
import jax.numpy as jnp
from jax.experimental import pallas as pl
from jax.experimental.pallas import tpu as pltpu


# ---------------------------------------------------------------------------
# Pallas kernel: per-batch patch-embedding + transformer block
# ---------------------------------------------------------------------------
def _layer_norm(v, gamma, beta, eps=1e-5):
    mu = jnp.mean(v, axis=-1, keepdims=True)
    var = jnp.mean((v - mu) ** 2, axis=-1, keepdims=True)
    return (v - mu) * jax.lax.rsqrt(var + eps) * gamma + beta


def _transgan_block_kernel(patches_ref, pos_ref, vec_ref,
                           wproj_ref, wqkv_ref, wo_ref, w1_ref, w2_ref,
                           o_ref, *, num_heads):
    f32, bf16 = jnp.float32, jnp.bfloat16
    L, E = pos_ref.shape
    dh = E // num_heads
    Fdim = w1_ref.shape[1]

    # ---- unpack the packed bias/gamma/beta table (static slices) ----
    b_proj = vec_ref[0:1, 0:E]
    g1     = vec_ref[1:2, 0:E]
    be1    = vec_ref[2:3, 0:E]
    b_qkv  = vec_ref[3:4, 0:3 * E]
    b_o    = vec_ref[4:5, 0:E]
    g2     = vec_ref[5:6, 0:E]
    be2    = vec_ref[6:7, 0:E]
    b_1    = vec_ref[7:8, 0:Fdim]
    b_2    = vec_ref[8:9, 0:E]

    # ---- patch embedding: (L, Din) @ (Din, E) + bias + positional emb ----
    x = jnp.dot(patches_ref[0].astype(bf16), wproj_ref[...],
                preferred_element_type=f32)
    x = x + b_proj + pos_ref[...]                      # (L, E) f32

    # ---- multi-head self-attention (pre-norm; residual uses un-normed x) ----
    xn = _layer_norm(x, g1, be1)
    qkv = jnp.dot(xn.astype(bf16), wqkv_ref[...],      # ONE fused QKV matmul
                  preferred_element_type=f32) + b_qkv  # (L, 3E)
    scale = 1.0 / math.sqrt(E)        # reference divides by emb_size ** 0.5
    q = qkv[:, 0:E] * scale
    k = qkv[:, E:2 * E]
    v = qkv[:, 2 * E:3 * E]

    ctx_heads = []
    for h in range(num_heads):        # static, fully unrolled (num_heads small)
        sl = slice(h * dh, (h + 1) * dh)
        qh = q[:, sl].astype(bf16)
        kh = k[:, sl].astype(bf16)
        vh = v[:, sl].astype(bf16)
        e_h = jnp.einsum('ld,md->lm', qh, kh, preferred_element_type=f32)
        e_h = e_h - jnp.max(e_h, axis=-1, keepdims=True)
        p_h = jnp.exp(e_h)
        p_h = p_h * pl.reciprocal(jnp.sum(p_h, axis=-1, keepdims=True),
                                  approx=True)
        ctx_heads.append(jnp.einsum('lm,md->ld', p_h.astype(bf16), vh,
                                    preferred_element_type=f32))
    # heads-concat back to (L, E) and a single unify-heads matmul
    ctx = jnp.concatenate(ctx_heads, axis=-1)
    attn = jnp.dot(ctx.astype(bf16), wo_ref[...],
                   preferred_element_type=f32) + b_o
    x = attn + x

    # ---- feed-forward (pre-norm) ----
    xn2 = _layer_norm(x, g2, be2)
    h1 = jnp.dot(xn2.astype(bf16), w1_ref[...],
                 preferred_element_type=f32) + b_1
    h1 = jnp.maximum(h1, 0.0)
    ff = jnp.dot(h1.astype(bf16), w2_ref[...],
                 preferred_element_type=f32) + b_2
    o_ref[0] = ff + x


# ---------------------------------------------------------------------------
# Wrapper / forward pass
# ---------------------------------------------------------------------------
def upsampling(x):
    # Reproduces Upsampling.forward exactly (incl. the -1 folding a factor of
    # 4 into the batch dim and PixelShuffle treating dim -3 as channels).
    B, L, C = x.shape
    re_size = int(math.isqrt(L // 2))
    re_ch = C // 4
    x = jnp.reshape(x, (-1, re_size, re_size * 2, re_ch))    # (4B, re, 2re, C/4)
    N, Cin, Hh, Ww = x.shape
    r = 2
    Cout = Cin // (r * r)
    x = x.reshape(N, Cout, r, r, Hh, Ww)
    x = jnp.transpose(x, (0, 1, 4, 2, 5, 3))                  # (N, Cout, H, r, W, r)
    x = x.reshape(N, Cout, Hh * r, Ww * r)
    return x


def transgan_forward(x, p, *, patch_size, num_heads):
    # x: (B, C, H, W) -- NCHW, see layout comment at top.
    B, C, H, W = x.shape
    ps = patch_size
    L, E = p["pos_emb"].shape
    Din = ps * ps * 2 * C
    Fdim = p["w1"].shape[1]

    # --- patch extraction (pure layout glue; plain JAX outside the kernel) ---
    xr = x.reshape(B, C, H // ps, ps, W // ps, ps)
    xr = jnp.transpose(xr, (0, 2, 4, 3, 5, 1))                # (B, H/p, W/p, p, p, C)
    patches = xr.reshape(B, L, Din)                           # (B, L, Din)

    kernel = functools.partial(_transgan_block_kernel, num_heads=num_heads)
    out = pl.pallas_call(
        kernel,
        out_shape=jax.ShapeDtypeStruct((B, L, E), jnp.float32),
        grid_spec=pltpu.PrefetchScalarGridSpec(
            num_scalar_prefetch=0,
            grid=(B,),
            in_specs=[
                pl.BlockSpec((1, L, Din), lambda b: (b, 0, 0)),   # patches (per batch)
                pl.BlockSpec((L, E), lambda b: (0, 0)),           # pos emb (shared)
                pl.BlockSpec(p["vec"].shape, lambda b: (0, 0)),   # packed bias table
                pl.BlockSpec((Din, E), lambda b: (0, 0)),         # w_proj
                pl.BlockSpec((E, 3 * E), lambda b: (0, 0)),       # fused w_qkv
                pl.BlockSpec((E, E), lambda b: (0, 0)),           # wo
                pl.BlockSpec((E, Fdim), lambda b: (0, 0)),        # w1
                pl.BlockSpec((Fdim, E), lambda b: (0, 0)),        # w2
            ],
            out_specs=pl.BlockSpec((1, L, E), lambda b: (b, 0, 0)),
        ),
        compiler_params=pltpu.CompilerParams(
            dimension_semantics=("parallel",)),
    )(patches, p["pos_emb"], p["vec"], p["w_proj"], p["w_qkv"],
      p["wo"], p["w1"], p["w2"])

    x3 = upsampling(out)                                      # (4B, 1, 2re, 2re)
    # TODO(synk): reference calls encoder()/upsampling()/encoder() again on this
    # 4-D tensor (LayerNorm size mismatch -> PyTorch error), then exit(); stop here.
    return x3


# ---------------------------------------------------------------------------
# Deterministic parameter init + one-time packing (outside jit)
# ---------------------------------------------------------------------------
def init_params(key, *, patch_size, emb_size, forward_expansion, img_h, img_w, in_ch):
    Din = patch_size * patch_size * 2 * in_ch
    L = (img_h // patch_size) * ((img_w // patch_size) // 2)
    ks = jax.random.split(key, 8)
    nrm = lambda k, shape, s=0.02: (s * jax.random.normal(k, shape)).astype(jnp.float32)
    zeros = lambda shape: jnp.zeros(shape, jnp.float32)
    ones = lambda shape: jnp.ones(shape, jnp.float32)
    return {
        "w_proj": nrm(ks[0], (Din, emb_size)),
        "b_proj": zeros((1, emb_size)),
        "pos_emb": nrm(ks[1], (L, emb_size), 1.0),            # torch.randn in reference
        "g1": ones((1, emb_size)), "be1": zeros((1, emb_size)),
        "wq": nrm(ks[2], (emb_size, emb_size)), "bq": zeros((1, emb_size)),
        "wk": nrm(ks[3], (emb_size, emb_size)), "bk": zeros((1, emb_size)),
        "wv": nrm(ks[4], (emb_size, emb_size)), "bv": zeros((1, emb_size)),
        "wo": nrm(ks[5], (emb_size, emb_size)), "bo": zeros((1, emb_size)),
        "g2": ones((1, emb_size)), "be2": zeros((1, emb_size)),
        "w1": nrm(ks[6], (emb_size, forward_expansion * emb_size)),
        "b1": zeros((1, forward_expansion * emb_size)),
        "w2": nrm(ks[7], (forward_expansion * emb_size, emb_size)),
        "b2": zeros((1, emb_size)),
    }


def prepare_params(params):
    """One-time (outside jit) weight fusion, bf16 casts and bias packing."""
    bf16 = jnp.bfloat16
    E = params["wq"].shape[0]
    Fdim = params["w1"].shape[1]

    w_qkv = jnp.concatenate([params["wq"], params["wk"], params["wv"]], axis=1)  # (E, 3E)
    b_qkv = jnp.concatenate([params["bq"], params["bk"], params["bv"]], axis=1)  # (1, 3E)

    pack_w = max(3 * E, Fdim, E)

    def row(v):
        r = jnp.zeros((1, pack_w), jnp.float32)
        return r.at[:, :v.shape[1]].set(v.astype(jnp.float32))

    vec = jnp.concatenate(
        [row(params["b_proj"]), row(params["g1"]), row(params["be1"]),
         row(b_qkv), row(params["bo"]), row(params["g2"]),
         row(params["be2"]), row(params["b1"]), row(params["b2"])], axis=0)

    return {
        "pos_emb": params["pos_emb"].astype(jnp.float32),
        "vec": vec,
        "w_proj": params["w_proj"].astype(bf16),
        "w_qkv": w_qkv.astype(bf16),
        "wo": params["wo"].astype(bf16),
        "w1": params["w1"].astype(bf16),
        "w2": params["w2"].astype(bf16),
    }


if __name__ == "__main__":
    patch_size, emb_size, num_heads, forward_expansion = 4, 32, 4, 4
    img_height = img_width = 32
    in_ch = 3
    B = 2

    key = jax.random.PRNGKey(0)
    kx, kp = jax.random.split(key)
    x = jax.random.normal(kx, (B, in_ch, img_height, img_width), dtype=jnp.float32)

    params = init_params(kp, patch_size=patch_size, emb_size=emb_size,
                         forward_expansion=forward_expansion,
                         img_h=img_height, img_w=img_width, in_ch=in_ch)
    prepped = prepare_params(params)          # bf16 cast / fusion done once, outside jit

    forward = jax.jit(functools.partial(transgan_forward,
                                        patch_size=patch_size,
                                        num_heads=num_heads))
    out = forward(x, prepped)
    out = jax.block_until_ready(out)
    assert out.shape == (4 * B, 1, 16, 16), out.shape
    assert bool(jnp.all(jnp.isfinite(out))), "non-finite output"
    print("KERNEL_OK")
</pallas_src>

<mosaic_0001>
module attributes {stable_mosaic.version = 11 : i64} {
  func.func @_transgan_block_kernel(%arg0: i32, %arg1: memref<1x32x96xf32, #tpu.memory_space<vmem>>, %arg2: memref<32x32xf32, #tpu.memory_space<vmem>>, %arg3: memref<9x128xf32, #tpu.memory_space<vmem>>, %arg4: memref<96x32xbf16, #tpu.memory_space<vmem>>, %arg5: memref<32x96xbf16, #tpu.memory_space<vmem>>, %arg6: memref<32x32xbf16, #tpu.memory_space<vmem>>, %arg7: memref<32x128xbf16, #tpu.memory_space<vmem>>, %arg8: memref<128x32xbf16, #tpu.memory_space<vmem>>, %arg9: memref<1x32x32xf32, #tpu.memory_space<vmem>>) attributes {dimension_semantics = [#tpu.dimension_semantics<parallel>], iteration_bounds = array<i64: 2>, scalar_prefetch = 0 : i64, scratch_operands = 0 : i64, tpu.core_type = #tpu.core_type<tc>, window_params = [{transform_indices = @transform_0, window_bounds = array<i64: 1, 32, 96>}, {pipeline_mode = #tpu.pipeline_mode<synchronous>, transform_indices = @transform_1, window_bounds = array<i64: 32, 32>}, {pipeline_mode = #tpu.pipeline_mode<synchronous>, transform_indices = @transform_2, window_bounds = array<i64: 9, 128>}, {pipeline_mode = #tpu.pipeline_mode<synchronous>, transform_indices = @transform_3, window_bounds = array<i64: 96, 32>}, {pipeline_mode = #tpu.pipeline_mode<synchronous>, transform_indices = @transform_4, window_bounds = array<i64: 32, 96>}, {pipeline_mode = #tpu.pipeline_mode<synchronous>, transform_indices = @transform_5, window_bounds = array<i64: 32, 32>}, {pipeline_mode = #tpu.pipeline_mode<synchronous>, transform_indices = @transform_6, window_bounds = array<i64: 32, 128>}, {pipeline_mode = #tpu.pipeline_mode<synchronous>, transform_indices = @transform_7, window_bounds = array<i64: 128, 32>}, {transform_indices = @transform_8, window_bounds = array<i64: 1, 32, 32>}]} {
    %c0 = arith.constant 0 : index
    %c0_0 = arith.constant 0 : index
    %0 = vector.load %arg3[%c0, %c0_0] : memref<9x128xf32, #tpu.memory_space<vmem>>, vector<1x32xf32>
    %c1 = arith.constant 1 : index
    %c0_1 = arith.constant 0 : index
    %1 = vector.load %arg3[%c1, %c0_1] : memref<9x128xf32, #tpu.memory_space<vmem>>, vector<1x32xf32>
    %c2 = arith.constant 2 : index
    %c0_2 = arith.constant 0 : index
    %2 = vector.load %arg3[%c2, %c0_2] : memref<9x128xf32, #tpu.memory_space<vmem>>, vector<1x32xf32>
    %c3 = arith.constant 3 : index
    %c0_3 = arith.constant 0 : index
    %3 = vector.load %arg3[%c3, %c0_3] : memref<9x128xf32, #tpu.memory_space<vmem>>, vector<1x96xf32>
    %c4 = arith.constant 4 : index
    %c0_4 = arith.constant 0 : index
    %4 = vector.load %arg3[%c4, %c0_4] : memref<9x128xf32, #tpu.memory_space<vmem>>, vector<1x32xf32>
    %c5 = arith.constant 5 : index
    %c0_5 = arith.constant 0 : index
    %5 = vector.load %arg3[%c5, %c0_5] : memref<9x128xf32, #tpu.memory_space<vmem>>, vector<1x32xf32>
    %c6 = arith.constant 6 : index
    %c0_6 = arith.constant 0 : index
    %6 = vector.load %arg3[%c6, %c0_6] : memref<9x128xf32, #tpu.memory_space<vmem>>, vector<1x32xf32>
    %c7 = arith.constant 7 : index
    %c0_7 = arith.constant 0 : index
    %7 = vector.load %arg3[%c7, %c0_7] : memref<9x128xf32, #tpu.memory_space<vmem>>, vector<1x128xf32>
    %c8 = arith.constant 8 : index
    %c0_8 = arith.constant 0 : index
    %8 = vector.load %arg3[%c8, %c0_8] : memref<9x128xf32, #tpu.memory_space<vmem>>, vector<1x32xf32>
    %c0_9 = arith.constant 0 : index
    %c0_10 = arith.constant 0 : index
    %c0_11 = arith.constant 0 : index
    %9 = vector.load %arg1[%c0_9, %c0_10, %c0_11] : memref<1x32x96xf32, #tpu.memory_space<vmem>>, vector<1x32x96xf32>
    %10 = vector.shape_cast %9 : vector<1x32x96xf32> to vector<32x96xf32>
    %11 = arith.truncf %10 : vector<32x96xf32> to vector<32x96xbf16>
    %c0_12 = arith.constant 0 : index
    %c0_13 = arith.constant 0 : index
    %12 = vector.load %arg4[%c0_12, %c0_13] : memref<96x32xbf16, #tpu.memory_space<vmem>>, vector<96x32xbf16>
    %cst = arith.constant dense<0.000000e+00> : vector<32x32xf32>
    %13 = tpu.matmul %11, %12, %cst {dimension_numbers = #tpu.dot_dimension_numbers<[1], [0], [0], [1], [0, 0, 1, 1], [], []>} : vector<32x96xbf16>, vector<96x32xbf16>, vector<32x32xf32> -> vector<32x32xf32>
    %14 = vector.broadcast %0 : vector<1x32xf32> to vector<32x32xf32>
    %15 = arith.addf %13, %14 : vector<32x32xf32>
    %c0_14 = arith.constant 0 : index
    %c0_15 = arith.constant 0 : index
    %16 = vector.load %arg2[%c0_14, %c0_15] : memref<32x32xf32, #tpu.memory_space<vmem>>, vector<32x32xf32>
    %17 = arith.addf %15, %16 : vector<32x32xf32>
    %cst_16 = arith.constant dense<0.000000e+00> : vector<32xf32>
    %18 = vector.multi_reduction <add>, %17, %cst_16 [1] : vector<32x32xf32> to vector<32xf32>
    %19 = vector.shape_cast %18 : vector<32xf32> to vector<32x1xf32>
    %cst_17 = arith.constant 3.200000e+01 : f32
    %20 = vector.broadcast %cst_17 : f32 to vector<32x1xf32>
    %21 = arith.divf %19, %20 : vector<32x1xf32>
    %22 = vector.broadcast %21 : vector<32x1xf32> to vector<32x32xf32>
    %23 = arith.subf %17, %22 : vector<32x32xf32>
    %24 = arith.mulf %23, %23 : vector<32x32xf32>
    %cst_18 = arith.constant dense<0.000000e+00> : vector<32xf32>
    %25 = vector.multi_reduction <add>, %24, %cst_18 [1] : vector<32x32xf32> to vector<32xf32>
    %26 = vector.shape_cast %25 : vector<32xf32> to vector<32x1xf32>
    %cst_19 = arith.constant 3.200000e+01 : f32
    %27 = vector.broadcast %cst_19 : f32 to vector<32x1xf32>
    %28 = arith.divf %26, %27 : vector<32x1xf32>
    %29 = vector.broadcast %21 : vector<32x1xf32> to vector<32x32xf32>
    %30 = arith.subf %17, %29 : vector<32x32xf32>
    %cst_20 = arith.constant 9.99999974E-6 : f32
    %31 = vector.broadcast %cst_20 : f32 to vector<32x1xf32>
    %32 = arith.addf %28, %31 : vector<32x1xf32>
    %33 = math.rsqrt %32 : vector<32x1xf32>
    %34 = vector.broadcast %33 : vector<32x1xf32> to vector<32x32xf32>
    %35 = arith.mulf %30, %34 : vector<32x32xf32>
    %36 = vector.broadcast %1 : vector<1x32xf32> to vector<32x32xf32>
    %37 = arith.mulf %35, %36 : vector<32x32xf32>
    %38 = vector.broadcast %2 : vector<1x32xf32> to vector<32x32xf32>
    %39 = arith.addf %37, %38 : vector<32x32xf32>
    %40 = arith.truncf %39 : vector<32x32xf32> to vector<32x32xbf16>
    %c0_21 = arith.constant 0 : index
    %c0_22 = arith.constant 0 : index
    %41 = vector.load %arg5[%c0_21, %c0_22] : memref<32x96xbf16, #tpu.memory_space<vmem>>, vector<32x96xbf16>
    %cst_23 = arith.constant dense<0.000000e+00> : vector<32x96xf32>
    %42 = tpu.matmul %40, %41, %cst_23 {dimension_numbers = #tpu.dot_dimension_numbers<[1], [0], [0], [1], [0, 0, 1, 1], [], []>} : vector<32x32xbf16>, vector<32x96xbf16>, vector<32x96xf32> -> vector<32x96xf32>
    %43 = vector.broadcast %3 : vector<1x96xf32> to vector<32x96xf32>
    %44 = arith.addf %42, %43 : vector<32x96xf32>
    %45 = vector.extract_strided_slice %44 {offsets = [0, 0], sizes = [32, 32], strides = [1, 1]} : vector<32x96xf32> to vector<32x32xf32>
    %cst_24 = arith.constant 0.176776692 : f32
    %46 = vector.broadcast %cst_24 : f32 to vector<32x32xf32>
    %47 = arith.mulf %45, %46 : vector<32x32xf32>
    %48 = vector.extract_strided_slice %44 {offsets = [0, 32], sizes = [32, 32], strides = [1, 1]} : vector<32x96xf32> to vector<32x32xf32>
    %49 = vector.extract_strided_slice %44 {offsets = [0, 64], sizes = [32, 32], strides = [1, 1]} : vector<32x96xf32> to vector<32x32xf32>
    %50 = vector.extract_strided_slice %47 {offsets = [0, 0], sizes = [32, 8], strides = [1, 1]} : vector<32x32xf32> to vector<32x8xf32>
    %51 = arith.truncf %50 : vector<32x8xf32> to vector<32x8xbf16>
    %52 = vector.extract_strided_slice %48 {offsets = [0, 0], sizes = [32, 8], strides = [1, 1]} : vector<32x32xf32> to vector<32x8xf32>
    %53 = arith.truncf %52 : vector<32x8xf32> to vector<32x8xbf16>
    %54 = vector.extract_strided_slice %49 {offsets = [0, 0], sizes = [32, 8], strides = [1, 1]} : vector<32x32xf32> to vector<32x8xf32>
    %55 = arith.truncf %54 : vector<32x8xf32> to vector<32x8xbf16>
    "tpu.trace_start"() <{level = 10 : i32, message = "ld,md->lm"}> : () -> ()
    %cst_25 = arith.constant dense<0.000000e+00> : vector<32x32xf32>
    %56 = tpu.matmul %51, %53, %cst_25 {dimension_numbers = #tpu.dot_dimension_numbers<[1], [1], [0], [0], [0, 0, 1, 0], [], []>} : vector<32x8xbf16>, vector<32x8xbf16>, vector<32x32xf32> -> vector<32x32xf32>
    "tpu.trace_stop"() : () -> ()
    %cst_26 = arith.constant dense<0xFF800000> : vector<32xf32>
    %57 = vector.multi_reduction <maximumf>, %56, %cst_26 [1] : vector<32x32xf32> to vector<32xf32>
    %58 = vector.shape_cast %57 : vector<32xf32> to vector<32x1xf32>
    %59 = vector.broadcast %58 : vector<32x1xf32> to vector<32x32xf32>
    %60 = arith.subf %56, %59 : vector<32x32xf32>
    %61 = math.exp %60 : vector<32x32xf32>
    %cst_27 = arith.constant dense<0.000000e+00> : vector<32xf32>
    %62 = vector.multi_reduction <add>, %61, %cst_27 [1] : vector<32x32xf32> to vector<32xf32>
    %63 = vector.shape_cast %62 : vector<32xf32> to vector<32x1xf32>
    %64 = tpu.reciprocal %63 {approx = true} : vector<32x1xf32> -> vector<32x1xf32>
    %65 = vector.broadcast %64 : vector<32x1xf32> to vector<32x32xf32>
    %66 = arith.mulf %61, %65 : vector<32x32xf32>
    %67 = arith.truncf %66 : vector<32x32xf32> to vector<32x32xbf16>
    "tpu.trace_start"() <{level = 10 : i32, message = "lm,md->ld"}> : () -> ()
    %cst_28 = arith.constant dense<0.000000e+00> : vector<32x8xf32>
    %68 = tpu.matmul %67, %55, %cst_28 {dimension_numbers = #tpu.dot_dimension_numbers<[1], [0], [0], [1], [0, 0, 1, 1], [], []>} : vector<32x32xbf16>, vector<32x8xbf16>, vector<32x8xf32> -> vector<32x8xf32>
    "tpu.trace_stop"() : () -> ()
    %69 = vector.extract_strided_slice %47 {offsets = [0, 8], sizes = [32, 8], strides = [1, 1]} : vector<32x32xf32> to vector<32x8xf32>
    %70 = arith.truncf %69 : vector<32x8xf32> to vector<32x8xbf16>
    %71 = vector.extract_strided_slice %48 {offsets = [0, 8], sizes = [32, 8], strides = [1, 1]} : vector<32x32xf32> to vector<32x8xf32>
    %72 = arith.truncf %71 : vector<32x8xf32> to vector<32x8xbf16>
    %73 = vector.extract_strided_slice %49 {offsets = [0, 8], sizes = [32, 8], strides = [1, 1]} : vector<32x32xf32> to vector<32x8xf32>
    %74 = arith.truncf %73 : vector<32x8xf32> to vector<32x8xbf16>
    "tpu.trace_start"() <{level = 10 : i32, message = "ld,md->lm"}> : () -> ()
    %cst_29 = arith.constant dense<0.000000e+00> : vector<32x32xf32>
    %75 = tpu.matmul %70, %72, %cst_29 {dimension_numbers = #tpu.dot_dimension_numbers<[1], [1], [0], [0], [0, 0, 1, 0], [], []>} : vector<32x8xbf16>, vector<32x8xbf16>, vector<32x32xf32> -> vector<32x32xf32>
    "tpu.trace_stop"() : () -> ()
    %cst_30 = arith.constant dense<0xFF800000> : vector<32xf32>
    %76 = vector.multi_reduction <maximumf>, %75, %cst_30 [1] : vector<32x32xf32> to vector<32xf32>
    %77 = vector.shape_cast %76 : vector<32xf32> to vector<32x1xf32>
    %78 = vector.broadcast %77 : vector<32x1xf32> to vector<32x32xf32>
    %79 = arith.subf %75, %78 : vector<32x32xf32>
    %80 = math.exp %79 : vector<32x32xf32>
    %cst_31 = arith.constant dense<0.000000e+00> : vector<32xf32>
    %81 = vector.multi_reduction <add>, %80, %cst_31 [1] : vector<32x32xf32> to vector<32xf32>
    %82 = vector.shape_cast %81 : vector<32xf32> to vector<32x1xf32>
    %83 = tpu.reciprocal %82 {approx = true} : vector<32x1xf32> -> vector<32x1xf32>
    %84 = vector.broadcast %83 : vector<32x1xf32> to vector<32x32xf32>
    %85 = arith.mulf %80, %84 : vector<32x32xf32>
    %86 = arith.truncf %85 : vector<32x32xf32> to vector<32x32xbf16>
    "tpu.trace_start"() <{level = 10 : i32, message = "lm,md->ld"}> : () -> ()
    %cst_32 = arith.constant dense<0.000000e+00> : vector<32x8xf32>
    %87 = tpu.matmul %86, %74, %cst_32 {dimension_numbers = #tpu.dot_dimension_numbers<[1], [0], [0], [1], [0, 0, 1, 1], [], []>} : vector<32x32xbf16>, vector<32x8xbf16>, vector<32x8xf32> -> vector<32x8xf32>
    "tpu.trace_stop"() : () -> ()
    %88 = vector.extract_strided_slice %47 {offsets = [0, 16], sizes = [32, 8], strides = [1, 1]} : vector<32x32xf32> to vector<32x8xf32>
    %89 = arith.truncf %88 : vector<32x8xf32> to vector<32x8xbf16>
    %90 = vector.extract_strided_slice %48 {offsets = [0, 16], sizes = [32, 8], strides = [1, 1]} : vector<32x32xf32> to vector<32x8xf32>
    %91 = arith.truncf %90 : vector<32x8xf32> to vector<32x8xbf16>
    %92 = vector.extract_strided_slice %49 {offsets = [0, 16], sizes = [32, 8], strides = [1, 1]} : vector<32x32xf32> to vector<32x8xf32>
    %93 = arith.truncf %92 : vector<32x8xf32> to vector<32x8xbf16>
    "tpu.trace_start"() <{level = 10 : i32, message = "ld,md->lm"}> : () -> ()
    %cst_33 = arith.constant dense<0.000000e+00> : vector<32x32xf32>
    %94 = tpu.matmul %89, %91, %cst_33 {dimension_numbers = #tpu.dot_dimension_numbers<[1], [1], [0], [0], [0, 0, 1, 0], [], []>} : vector<32x8xbf16>, vector<32x8xbf16>, vector<32x32xf32> -> vector<32x32xf32>
    "tpu.trace_stop"() : () -> ()
    %cst_34 = arith.constant dense<0xFF800000> : vector<32xf32>
    %95 = vector.multi_reduction <maximumf>, %94, %cst_34 [1] : vector<32x32xf32> to vector<32xf32>
    %96 = vector.shape_cast %95 : vector<32xf32> to vector<32x1xf32>
    %97 = vector.broadcast %96 : vector<32x1xf32> to vector<32x32xf32>
    %98 = arith.subf %94, %97 : vector<32x32xf32>
    %99 = math.exp %98 : vector<32x32xf32>
    %cst_35 = arith.constant dense<0.000000e+00> : vector<32xf32>
    %100 = vector.multi_reduction <add>, %99, %cst_35 [1] : vector<32x32xf32> to vector<32xf32>
    %101 = vector.shape_cast %100 : vector<32xf32> to vector<32x1xf32>
    %102 = tpu.reciprocal %101 {approx = true} : vector<32x1xf32> -> vector<32x1xf32>
    %103 = vector.broadcast %102 : vector<32x1xf32> to vector<32x32xf32>
    %104 = arith.mulf %99, %103 : vector<32x32xf32>
    %105 = arith.truncf %104 : vector<32x32xf32> to vector<32x32xbf16>
    "tpu.trace_start"() <{level = 10 : i32, message = "lm,md->ld"}> : () -> ()
    %cst_36 = arith.constant dense<0.000000e+00> : vector<32x8xf32>
    %106 = tpu.matmul %105, %93, %cst_36 {dimension_numbers = #tpu.dot_dimension_numbers<[1], [0], [0], [1], [0, 0, 1, 1], [], []>} : vector<32x32xbf16>, vector<32x8xbf16>, vector<32x8xf32> -> vector<32x8xf32>
    "tpu.trace_stop"() : () -> ()
    %107 = vector.extract_strided_slice %47 {offsets = [0, 24], sizes = [32, 8], strides = [1, 1]} : vector<32x32xf32> to vector<32x8xf32>
    %108 = arith.truncf %107 : vector<32x8xf32> to vector<32x8xbf16>
    %109 = vector.extract_strided_slice %48 {offsets = [0, 24], sizes = [32, 8], strides = [1, 1]} : vector<32x32xf32> to vector<32x8xf32>
    %110 = arith.truncf %109 : vector<32x8xf32> to vector<32x8xbf16>
    %111 = vector.extract_strided_slice %49 {offsets = [0, 24], sizes = [32, 8], strides = [1, 1]} : vector<32x32xf32> to vector<32x8xf32>
    %112 = arith.truncf %111 : vector<32x8xf32> to vector<32x8xbf16>
    "tpu.trace_start"() <{level = 10 : i32, message = "ld,md->lm"}> : () -> ()
    %cst_37 = arith.constant dense<0.000000e+00> : vector<32x32xf32>
    %113 = tpu.matmul %108, %110, %cst_37 {dimension_numbers = #tpu.dot_dimension_numbers<[1], [1], [0], [0], [0, 0, 1, 0], [], []>} : vector<32x8xbf16>, vector<32x8xbf16>, vector<32x32xf32> -> vector<32x32xf32>
    "tpu.trace_stop"() : () -> ()
    %cst_38 = arith.constant dense<0xFF800000> : vector<32xf32>
    %114 = vector.multi_reduction <maximumf>, %113, %cst_38 [1] : vector<32x32xf32> to vector<32xf32>
    %115 = vector.shape_cast %114 : vector<32xf32> to vector<32x1xf32>
    %116 = vector.broadcast %115 : vector<32x1xf32> to vector<32x32xf32>
    %117 = arith.subf %113, %116 : vector<32x32xf32>
    %118 = math.exp %117 : vector<32x32xf32>
    %cst_39 = arith.constant dense<0.000000e+00> : vector<32xf32>
    %119 = vector.multi_reduction <add>, %118, %cst_39 [1] : vector<32x32xf32> to vector<32xf32>
    %120 = vector.shape_cast %119 : vector<32xf32> to vector<32x1xf32>
    %121 = tpu.reciprocal %120 {approx = true} : vector<32x1xf32> -> vector<32x1xf32>
    %122 = vector.broadcast %121 : vector<32x1xf32> to vector<32x32xf32>
    %123 = arith.mulf %118, %122 : vector<32x32xf32>
    %124 = arith.truncf %123 : vector<32x32xf32> to vector<32x32xbf16>
    "tpu.trace_start"() <{level = 10 : i32, message = "lm,md->ld"}> : () -> ()
    %cst_40 = arith.constant dense<0.000000e+00> : vector<32x8xf32>
    %125 = tpu.matmul %124, %112, %cst_40 {dimension_numbers = #tpu.dot_dimension_numbers<[1], [0], [0], [1], [0, 0, 1, 1], [], []>} : vector<32x32xbf16>, vector<32x8xbf16>, vector<32x8xf32> -> vector<32x8xf32>
    "tpu.trace_stop"() : () -> ()
    %126 = tpu.concatenate %68, %87, %106, %125 in 1 : vector<32x8xf32>, vector<32x8xf32>, vector<32x8xf32>, vector<32x8xf32> -> vector<32x32xf32>
    %127 = arith.truncf %126 : vector<32x32xf32> to vector<32x32xbf16>
    %c0_41 = arith.constant 0 : index
    %c0_42 = arith.constant 0 : index
    %128 = vector.load %arg6[%c0_41, %c0_42] : memref<32x32xbf16, #tpu.memory_space<vmem>>, vector<32x32xbf16>
    %cst_43 = arith.constant dense<0.000000e+00> : vector<32x32xf32>
    %129 = tpu.matmul %127, %128, %cst_43 {dimension_numbers = #tpu.dot_dimension_numbers<[1], [0], [0], [1], [0, 0, 1, 1], [], []>} : vector<32x32xbf16>, vector<32x32xbf16>, vector<32x32xf32> -> vector<32x32xf32>
    %130 = vector.broadcast %4 : vector<1x32xf32> to vector<32x32xf32>
    %131 = arith.addf %129, %130 : vector<32x32xf32>
    %132 = arith.addf %131, %17 : vector<32x32xf32>
    %cst_44 = arith.constant dense<0.000000e+00> : vector<32xf32>
    %133 = vector.multi_reduction <add>, %132, %cst_44 [1] : vector<32x32xf32> to vector<32xf32>
    %134 = vector.shape_cast %133 : vector<32xf32> to vector<32x1xf32>
    %cst_45 = arith.constant 3.200000e+01 : f32
    %135 = vector.broadcast %cst_45 : f32 to vector<32x1xf32>
    %136 = arith.divf %134, %135 : vector<32x1xf32>
    %137 = vector.broadcast %136 : vector<32x1xf32> to vector<32x32xf32>
    %138 = arith.subf %132, %137 : vector<32x32xf32>
    %139 = arith.mulf %138, %138 : vector<32x32xf32>
    %cst_46 = arith.constant dense<0.000000e+00> : vector<32xf32>
    %140 = vector.multi_reduction <add>, %139, %cst_46 [1] : vector<32x32xf32> to vector<32xf32>
    %141 = vector.shape_cast %140 : vector<32xf32> to vector<32x1xf32>
    %cst_47 = arith.constant 3.200000e+01 : f32
    %142 = vector.broadcast %cst_47 : f32 to vector<32x1xf32>
    %143 = arith.divf %141, %142 : vector<32x1xf32>
    %144 = vector.broadcast %136 : vector<32x1xf32> to vector<32x32xf32>
    %145 = arith.subf %132, %144 : vector<32x32xf32>
    %cst_48 = arith.constant 9.99999974E-6 : f32
    %146 = vector.broadcast %cst_48 : f32 to vector<32x1xf32>
    %147 = arith.addf %143, %146 : vector<32x1xf32>
    %148 = math.rsqrt %147 : vector<32x1xf32>
    %149 = vector.broadcast %148 : vector<32x1xf32> to vector<32x32xf32>
    %150 = arith.mulf %145, %149 : vector<32x32xf32>
    %151 = vector.broadcast %5 : vector<1x32xf32> to vector<32x32xf32>
    %152 = arith.mulf %150, %151 : vector<32x32xf32>
    %153 = vector.broadcast %6 : vector<1x32xf32> to vector<32x32xf32>
    %154 = arith.addf %152, %153 : vector<32x32xf32>
    %155 = arith.truncf %154 : vector<32x32xf32> to vector<32x32xbf16>
    %c0_49 = arith.constant 0 : index
    %c0_50 = arith.constant 0 : index
    %156 = vector.load %arg7[%c0_49, %c0_50] : memref<32x128xbf16, #tpu.memory_space<vmem>>, vector<32x128xbf16>
    %cst_51 = arith.constant dense<0.000000e+00> : vector<32x128xf32>
    %157 = tpu.matmul %155, %156, %cst_51 {dimension_numbers = #tpu.dot_dimension_numbers<[1], [0], [0], [1], [0, 0, 1, 1], [], []>} : vector<32x32xbf16>, vector<32x128xbf16>, vector<32x128xf32> -> vector<32x128xf32>
    %158 = vector.broadcast %7 : vector<1x128xf32> to vector<32x128xf32>
    %159 = arith.addf %157, %158 : vector<32x128xf32>
    %cst_52 = arith.constant 0.000000e+00 : f32
    %160 = vector.broadcast %cst_52 : f32 to vector<32x128xf32>
    %161 = arith.maximumf %159, %160 : vector<32x128xf32>
    %162 = arith.truncf %161 : vector<32x128xf32> to vector<32x128xbf16>
    %c0_53 = arith.constant 0 : index
    %c0_54 = arith.constant 0 : index
    %163 = vector.load %arg8[%c0_53, %c0_54] : memref<128x32xbf16, #tpu.memory_space<vmem>>, vector<128x32xbf16>
    %cst_55 = arith.constant dense<0.000000e+00> : vector<32x32xf32>
    %164 = tpu.matmul %162, %163, %cst_55 {dimension_numbers = #tpu.dot_dimension_numbers<[1], [0], [0], [1], [0, 0, 1, 1], [], []>} : vector<32x128xbf16>, vector<128x32xbf16>, vector<32x32xf32> -> vector<32x32xf32>
    %165 = vector.broadcast %8 : vector<1x32xf32> to vector<32x32xf32>
    %166 = arith.addf %164, %165 : vector<32x32xf32>
    %167 = arith.addf %166, %132 : vector<32x32xf32>
    %c0_56 = arith.constant 0 : index
    %c0_57 = arith.constant 0 : index
    %c0_58 = arith.constant 0 : index
    %168 = vector.load %arg9[%c0_56, %c0_57, %c0_58] : memref<1x32x32xf32, #tpu.memory_space<vmem>>, vector<1x32x32xf32>
    %169 = vector.shape_cast %168 : vector<1x32x32xf32> to vector<32x32xf32>
    %170 = vector.shape_cast %167 : vector<32x32xf32> to vector<1x32x32xf32>
    tpu.vector_store %arg9[%c0_56, %c0_57, %c0_58], %170 {strides = array<i32>} : memref<1x32x32xf32, #tpu.memory_space<vmem>>, vector<1x32x32xf32>,
    return
  }
  func.func @transform_0(%arg0: i32) -> (i32, i32, i32) {
    %c0_i32 = arith.constant 0 : i32
    %c0_i32_0 = arith.constant 0 : i32
    %c0_i32_1 = arith.constant 0 : i32
    return %arg0, %c0_i32, %c0_i32_0 : i32, i32, i32
  }
  func.func @transform_1(%arg0: i32) -> (i32, i32) {
    %c0_i32 = arith.constant 0 : i32
    %c0_i32_0 = arith.constant 0 : i32
    %c0_i32_1 = arith.constant 0 : i32
    return %c0_i32, %c0_i32_0 : i32, i32
  }
  func.func @transform_2(%arg0: i32) -> (i32, i32) {
    %c0_i32 = arith.constant 0 : i32
    %c0_i32_0 = arith.constant 0 : i32
    %c0_i32_1 = arith.constant 0 : i32
    return %c0_i32, %c0_i32_0 : i32, i32
  }
  func.func @transform_3(%arg0: i32) -> (i32, i32) {
    %c0_i32 = arith.constant 0 : i32
    %c0_i32_0 = arith.constant 0 : i32
    %c0_i32_1 = arith.constant 0 : i32
    return %c0_i32, %c0_i32_0 : i32, i32
  }
  func.func @transform_4(%arg0: i32) -> (i32, i32) {
    %c0_i32 = arith.constant 0 : i32
    %c0_i32_0 = arith.constant 0 : i32
    %c0_i32_1 = arith.constant 0 : i32
    return %c0_i32, %c0_i32_0 : i32, i32
  }
  func.func @transform_5(%arg0: i32) -> (i32, i32) {
    %c0_i32 = arith.constant 0 : i32
    %c0_i32_0 = arith.constant 0 : i32
    %c0_i32_1 = arith.constant 0 : i32
    return %c0_i32, %c0_i32_0 : i32, i32
  }
  func.func @transform_6(%arg0: i32) -> (i32, i32) {
    %c0_i32 = arith.constant 0 : i32
    %c0_i32_0 = arith.constant 0 : i32
    %c0_i32_1 = arith.constant 0 : i32
    return %c0_i32, %c0_i32_0 : i32, i32
  }
  func.func @transform_7(%arg0: i32) -> (i32, i32) {
    %c0_i32 = arith.constant 0 : i32
    %c0_i32_0 = arith.constant 0 : i32
    %c0_i32_1 = arith.constant 0 : i32
    return %c0_i32, %c0_i32_0 : i32, i32
  }
  func.func @transform_8(%arg0: i32) -> (i32, i32, i32) {
    %c0_i32 = arith.constant 0 : i32
    %c0_i32_0 = arith.constant 0 : i32
    %c0_i32_1 = arith.constant 0 : i32
    return %arg0, %c0_i32, %c0_i32_0 : i32, i32, i32
  }
}

</mosaic_0001>

<llo_original>
// kernel: transgan_forward.1
$region0: #{transgan_forward.1}
  #allocation0 [shape = 'u32[]', space=smem, size = 0x4, offset = 0x4, fixed_abs, tag = 'smem constant byte address 0x4 - core index']
  #allocation1 [shape = 'u32[144,128]{1,0:T(1,128)}', space=vmem, size = 0x12000, scoped, tag = 'internal scratch']
  %s0 = inlined_call_operand.vmem [shape: f32[2,32,96], index: 0, kind: input, shape index: {}]
  %s1 = inlined_call_operand.vmem [shape: f32[32,32], index: 1, kind: input, shape index: {}]
  %s2 = inlined_call_operand.vmem [shape: f32[9,128], index: 2, kind: input, shape index: {}]
  %s3 = inlined_call_operand.vmem [shape: bf16[96,32], index: 3, kind: input, shape index: {}]
  %s4 = inlined_call_operand.vmem [shape: bf16[32,96], index: 4, kind: input, shape index: {}]
  %s5 = inlined_call_operand.vmem [shape: bf16[32,32], index: 5, kind: input, shape index: {}]
  %s6 = inlined_call_operand.vmem [shape: bf16[32,128], index: 6, kind: input, shape index: {}]
  %s7 = inlined_call_operand.vmem [shape: bf16[128,32], index: 7, kind: input, shape index: {}]
  %s8 = inlined_call_operand.vmem [shape: f32[2,32,32], index: 8, kind: output, shape index: {}]
  %s9 = sld [smem:[#allocation0]]
  $region65: #{transgan_forward.1} parent=0
    _
  %s11 = ssub.s32 1, %s9
  %s12 = scalar_select 0, %s11, %s9
  loop: start=0, step=1, limit=4
  $region2: #{transgan_forward.1} parent=0 // loop_pre_header
    _
  $region3: #{transgan_forward.1} parent=0 // loop_header
    %s14 = sphi 0, %s18
    %p15 = scmp.ge.s32.totalorder %s14, 4
    %s24 = sphi 0, %s26
    %s27 = sphi 0, %s24
    %s28 = sphi 0, %s27
    %s44 = sphi 0, %s28
    %s48 = sphi 0, %s48
    %s50 = sphi 0, %s48
    %s51 = sphi 0, %s50
    %s65 = sphi 0, %s51
    %s69 = sphi 0, %s69
    %s71 = sphi 0, %s69
    %s72 = sphi 0, %s71
    %s86 = sphi 0, %s72
    %s90 = sphi 0, %s90
    %s92 = sphi 0, %s90
    %s93 = sphi 0, %s92
    %s107 = sphi 0, %s93
    %s111 = sphi 0, %s111
    %s113 = sphi 0, %s111
    %s114 = sphi 0, %s113
    %s128 = sphi 0, %s114
    %s132 = sphi 0, %s132
    %s134 = sphi 0, %s132
    %s135 = sphi 0, %s134
    %s149 = sphi 0, %s135
    %s153 = sphi 0, %s153
    %s155 = sphi 0, %s153
    %s156 = sphi 0, %s155
    %s170 = sphi 0, %s156
    %s174 = sphi 0, %s174
    %s176 = sphi 0, %s174
    %s177 = sphi 0, %s176
    %s191 = sphi 0, %s177
    %s197 = sphi 0, %s199
    %s200 = sphi 0, %s197
    %s201 = sphi 0, %s200
    %s217 = sphi 0, %s201
  $region4: #{transgan_forward.1} parent=0 // loop_header_branch
    %17 = sbr.rel (%p15) target = $region8
  $region5: #{transgan_forward.1} parent=0 // loop_body
    %s19 = ssub.s32 %s14, 1
    %s20 = ssub.s32 %s14, 2
    %s21 = sadd.s32 %s14, 1
    %s22 = ssub.s32 %s14, %s21
    %p23 = scmp.eq.s32.totalorder %s22, 0
    %s25 = sadd.s32 %s24, 1
    %s26 = scalar_select %p23, %s24, %s25
    %p29 = pneg %p23
    %p30 = scmp.eq.s32.totalorder %s14, 1
    %p31 = por %p29, %p30
    %p32 = scmp.ne.s32.totalorder %s24, %s27
    %p33 = scmp.eq.s32.totalorder %s14, 0
    %p34 = por %p32, %p33
    %p35 = scmp.ne.s32.totalorder %s24, %s27
    %p36 = scmp.eq.s32.totalorder %s19, 1
    %p37 = por %p35, %p36
    %p38 = scmp.ne.s32.totalorder %s27, %s28
    %p39 = scmp.eq.s32.totalorder %s19, 0
    %p40 = por %p38, %p39
    %p41 = scmp.ne.s32.totalorder %s27, %s28
    %p42 = scmp.eq.s32.totalorder %s20, 1
    %p43 = por %p41, %p42
    %p45 = scmp.ne.s32.totalorder %s28, %s44
    %p46 = scmp.eq.s32.totalorder %s20, 0
    %p47 = por %p45, %p46
    %s49 = sadd.s32 %s48, 1
    %p52 = scmp.eq.s32.totalorder %s14, 1
    %p53 = scmp.ne.s32.totalorder %s48, %s50
    %p54 = scmp.eq.s32.totalorder %s14, 0
    %p55 = por %p53, %p54
    %p56 = scmp.ne.s32.totalorder %s48, %s50
    %p57 = scmp.eq.s32.totalorder %s19, 1
    %p58 = por %p56, %p57
    %p59 = scmp.ne.s32.totalorder %s50, %s51
    %p60 = scmp.eq.s32.totalorder %s19, 0
    %p61 = por %p59, %p60
    %p62 = scmp.ne.s32.totalorder %s50, %s51
    %p63 = scmp.eq.s32.totalorder %s20, 1
    %p64 = por %p62, %p63
    %p66 = scmp.ne.s32.totalorder %s51, %s65
    %p67 = scmp.eq.s32.totalorder %s20, 0
    %p68 = por %p66, %p67
    %s70 = sadd.s32 %s69, 1
    %p73 = scmp.eq.s32.totalorder %s14, 1
    %p74 = scmp.ne.s32.totalorder %s69, %s71
    %p75 = scmp.eq.s32.totalorder %s14, 0
    %p76 = por %p74, %p75
    %p77 = scmp.ne.s32.totalorder %s69, %s71
    %p78 = scmp.eq.s32.totalorder %s19, 1
    %p79 = por %p77, %p78
    %p80 = scmp.ne.s32.totalorder %s71, %s72
    %p81 = scmp.eq.s32.totalorder %s19, 0
    %p82 = por %p80, %p81
    %p83 = scmp.ne.s32.totalorder %s71, %s72
    %p84 = scmp.eq.s32.totalorder %s20, 1
    %p85 = por %p83, %p84
    %p87 = scmp.ne.s32.totalorder %s72, %s86
    %p88 = scmp.eq.s32.totalorder %s20, 0
    %p89 = por %p87, %p88
    %s91 = sadd.s32 %s90, 1
    %p94 = scmp.eq.s32.totalorder %s14, 1
    %p95 = scmp.ne.s32.totalorder %s90, %s92
    %p96 = scmp.eq.s32.totalorder %s14, 0
    %p97 = por %p95, %p96
    %p98 = scmp.ne.s32.totalorder %s90, %s92
    %p99 = scmp.eq.s32.totalorder %s19, 1
    %p100 = por %p98, %p99
    %p101 = scmp.ne.s32.totalorder %s92, %s93
    %p102 = scmp.eq.s32.totalorder %s19, 0
    %p103 = por %p101, %p102
    %p104 = scmp.ne.s32.totalorder %s92, %s93
    %p105 = scmp.eq.s32.totalorder %s20, 1
    %p106 = por %p104, %p105
    %p108 = scmp.ne.s32.totalorder %s93, %s107
    %p109 = scmp.eq.s32.totalorder %s20, 0
    %p110 = por %p108, %p109
    %s112 = sadd.s32 %s111, 1
    %p115 = scmp.eq.s32.totalorder %s14, 1
    %p116 = scmp.ne.s32.totalorder %s111, %s113
    %p117 = scmp.eq.s32.totalorder %s14, 0
    %p118 = por %p116, %p117
    %p119 = scmp.ne.s32.totalorder %s111, %s113
    %p120 = scmp.eq.s32.totalorder %s19, 1
    %p121 = por %p119, %p120
    %p122 = scmp.ne.s32.totalorder %s113, %s114
    %p123 = scmp.eq.s32.totalorder %s19, 0
    %p124 = por %p122, %p123
    %p125 = scmp.ne.s32.totalorder %s113, %s114
    %p126 = scmp.eq.s32.totalorder %s20, 1
    %p127 = por %p125, %p126
    %p129 = scmp.ne.s32.totalorder %s114, %s128
    %p130 = scmp.eq.s32.totalorder %s20, 0
    %p131 = por %p129, %p130
    %s133 = sadd.s32 %s132, 1
    %p136 = scmp.eq.s32.totalorder %s14, 1
    %p137 = scmp.ne.s32.totalorder %s132, %s134
    %p138 = scmp.eq.s32.totalorder %s14, 0
    %p139 = por %p137, %p138
    %p140 = scmp.ne.s32.totalorder %s132, %s134
    %p141 = scmp.eq.s32.totalorder %s19, 1
    %p142 = por %p140, %p141
    %p143 = scmp.ne.s32.totalorder %s134, %s135
    %p144 = scmp.eq.s32.totalorder %s19, 0
    %p145 = por %p143, %p144
    %p146 = scmp.ne.s32.totalorder %s134, %s135
    %p147 = scmp.eq.s32.totalorder %s20, 1
    %p148 = por %p146, %p147
    %p150 = scmp.ne.s32.totalorder %s135, %s149
    %p151 = scmp.eq.s32.totalorder %s20, 0
    %p152 = por %p150, %p151
    %s154 = sadd.s32 %s153, 1
    %p157 = scmp.eq.s32.totalorder %s14, 1
    %p158 = scmp.ne.s32.totalorder %s153, %s155
    %p159 = scmp.eq.s32.totalorder %s14, 0
    %p160 = por %p158, %p159
    %p161 = scmp.ne.s32.totalorder %s153, %s155
    %p162 = scmp.eq.s32.totalorder %s19, 1
    %p163 = por %p161, %p162
    %p164 = scmp.ne.s32.totalorder %s155, %s156
    %p165 = scmp.eq.s32.totalorder %s19, 0
    %p166 = por %p164, %p165
    %p167 = scmp.ne.s32.totalorder %s155, %s156
    %p168 = scmp.eq.s32.totalorder %s20, 1
    %p169 = por %p167, %p168
    %p171 = scmp.ne.s32.totalorder %s156, %s170
    %p172 = scmp.eq.s32.totalorder %s20, 0
    %p173 = por %p171, %p172
    %s175 = sadd.s32 %s174, 1
    %p178 = scmp.eq.s32.totalorder %s14, 1
    %p179 = scmp.ne.s32.totalorder %s174, %s176
    %p180 = scmp.eq.s32.totalorder %s14, 0
    %p181 = por %p179, %p180
    %p182 = scmp.ne.s32.totalorder %s174, %s176
    %p183 = scmp.eq.s32.totalorder %s19, 1
    %p184 = por %p182, %p183
    %p185 = scmp.ne.s32.totalorder %s176, %s177
    %p186 = scmp.eq.s32.totalorder %s19, 0
    %p187 = por %p185, %p186
    %p188 = scmp.ne.s32.totalorder %s176, %s177
    %p189 = scmp.eq.s32.totalorder %s20, 1
    %p190 = por %p188, %p189
    %p192 = scmp.ne.s32.totalorder %s177, %s191
    %p193 = scmp.eq.s32.totalorder %s20, 0
    %p194 = por %p192, %p193
    %s195 = ssub.s32 %s14, %s21
    %p196 = scmp.eq.s32.totalorder %s195, 0
    %s198 = sadd.s32 %s197, 1
    %s199 = scalar_select %p196, %s197, %s198
    %p202 = pneg %p196
    %p203 = scmp.eq.s32.totalorder %s14, 1
    %p204 = por %p202, %p203
    %p205 = scmp.ne.s32.totalorder %s197, %s200
    %p206 = scmp.eq.s32.totalorder %s14, 0
    %p207 = por %p205, %p206
    %p208 = scmp.ne.s32.totalorder %s197, %s200
    %p209 = scmp.eq.s32.totalorder %s19, 1
    %p210 = por %p208, %p209
    %p211 = scmp.ne.s32.totalorder %s200, %s201
    %p212 = scmp.eq.s32.totalorder %s19, 0
    %p213 = por %p211, %p212
    %p214 = scmp.ne.s32.totalorder %s200, %s201
    %p215 = scmp.eq.s32.totalorder %s20, 1
    %p216 = por %p214, %p215
    %p218 = scmp.ne.s32.totalorder %s201, %s217
    %p219 = scmp.eq.s32.totalorder %s20, 0
    %p220 = por %p218, %p219
    %p221 = scmp.le.s32.totalorder 1, %s14
    %p222 = scmp.lt.s32.totalorder %s14, 3
    %p223 = pnand %p221, %p222
    %p224 = pneg %p223
    // Predicated region
    $region9: #{transgan_forward.1} parent=5 // pred_check
      _
    $region10: #{transgan_forward.1} parent=5 // pred_check_branch
      %226 = sbr.rel (%p223) target = $region12
    $region11: #{transgan_forward.1} parent=5 // pred_region
      %s227 = ssub.s32 %s14, 1
      // Predicated region
      $region13: #{transgan_forward.1} parent=11 // pred_check
        %p228 = pneg %p61
      $region14: #{transgan_forward.1} parent=11 // pred_check_branch
        %230 = sbr.rel (%p228) target = $region16
      $region15: #{transgan_forward.1} parent=11 // pred_region
        _
      $region16: #{transgan_forward.1} parent=11 // pred_fallthru
        _
      // Predicated region
      $region17: #{transgan_forward.1} parent=11 // pred_check
        %p231 = pneg %p82
      $region18: #{transgan_forward.1} parent=11 // pred_check_branch
        %233 = sbr.rel (%p231) target = $region20
      $region19: #{transgan_forward.1} parent=11 // pred_region
        _
      $region20: #{transgan_forward.1} parent=11 // pred_fallthru
        _
      // Predicated region
      $region21: #{transgan_forward.1} parent=11 // pred_check
        %p234 = pneg %p103
      $region22: #{transgan_forward.1} parent=11 // pred_check_branch
        %236 = sbr.rel (%p234) target = $region24
      $region23: #{transgan_forward.1} parent=11 // pred_region
        _
      $region24: #{transgan_forward.1} parent=11 // pred_fallthru
        _
      // Predicated region
      $region25: #{transgan_forward.1} parent=11 // pred_check
        %p237 = pneg %p124
      $region26: #{transgan_forward.1} parent=11 // pred_check_branch
        %239 = sbr.rel (%p237) target = $region28
      $region27: #{transgan_forward.1} parent=11 // pred_region
        _
      $region28: #{transgan_forward.1} parent=11 // pred_fallthru
        _
      // Predicated region
      $region29: #{transgan_forward.1} parent=11 // pred_check
        %p240 = pneg %p145
      $region30: #{transgan_forward.1} parent=11 // pred_check_branch
        %242 = sbr.rel (%p240) target = $region32
      $region31: #{transgan_forward.1} parent=11 // pred_region
        _
      $region32: #{transgan_forward.1} parent=11 // pred_fallthru
        _
      // Predicated region
      $region33: #{transgan_forward.1} parent=11 // pred_check
        %p243 = pneg %p166
      $region34: #{transgan_forward.1} parent=11 // pred_check_branch
        %245 = sbr.rel (%p243) target = $region36
      $region35: #{transgan_forward.1} parent=11 // pred_region
        _
      $region36: #{transgan_forward.1} parent=11 // pred_fallthru
        _
      // Predicated region
      $region37: #{transgan_forward.1} parent=11 // pred_check
        %p246 = pneg %p187
      $region38: #{transgan_forward.1} parent=11 // pred_check_branch
        %248 = sbr.rel (%p246) target = $region40
      $region39: #{transgan_forward.1} parent=11 // pred_region
        _
      $region40: #{transgan_forward.1} parent=11 // pred_fallthru
        _
    $region12: #{transgan_forward.1} parent=5 // pred_fallthru
      _
    %p249 = scmp.lt.s32.totalorder %s14, 2
    // Predicated region
    $region41: #{transgan_forward.1} parent=5 // pred_check
      %p250 = pneg %p249
    $region42: #{transgan_forward.1} parent=5 // pred_check_branch
      %252 = sbr.rel (%p250) target = $region44
    $region43: #{transgan_forward.1} parent=5 // pred_region
      // Predicated region
      $region45: #{transgan_forward.1} parent=43 // pred_check
        %p253 = pneg %p34
      $region46: #{transgan_forward.1} parent=43 // pred_check_branch
        %255 = sbr.rel (%p253) target = $region48
      $region47: #{transgan_forward.1} parent=43 // pred_region
        %p256 = scmp.lt.s32.totalorder %s14, 1
        %s257 = scalar_select %p256, %s14, 1
        %s258 = smul.addr %s257, 4
        %s259 = smul.addr %s258, 8
        %s260 = scalar_lea.vmem %s0, %s259
      $region48: #{transgan_forward.1} parent=43 // pred_fallthru
        _
    $region44: #{transgan_forward.1} parent=5 // pred_fallthru
      _
    %p261 = scmp.le.s32.totalorder 1, %s14
    %p262 = scmp.lt.s32.totalorder %s14, 3
    %p263 = pnand %p261, %p262
    %p264 = pneg %p263
    // Predicated region
    $region49: #{transgan_forward.1} parent=5 // pred_check
      _
    $region50: #{transgan_forward.1} parent=5 // pred_check_branch
      %266 = sbr.rel (%p263) target = $region52
    $region51: #{transgan_forward.1} parent=5 // pred_region
      %s267 = ssub.s32 %s14, 1
      %p268 = scmp.lt.s32.totalorder %s19, 1
      %s269 = scalar_select %p268, %s19, 1
      %s270 = smul.addr %s269, 4
      %s271 = smul.addr %s270, 8
      %s272 = scalar_lea.vmem %s0, %s271
      %p273 = pneg %p40
      %p274 = pneg %p37
      %p275 = pneg %p61
      %p276 = pneg %p58
      %p277 = pneg %p82
      %p278 = pneg %p79
      %p279 = pneg %p103
      %p280 = pneg %p100
      %p281 = pneg %p124
      %p282 = pneg %p121
      %p283 = pneg %p145
      %p284 = pneg %p142
      %p285 = pneg %p166
      %p286 = pneg %p163
      %p287 = pneg %p187
      %p288 = pneg %p184
      %p289 = pneg %p213
      %p290 = pneg %p210
      %p291 = scmp.lt.s32.totalorder %s19, 1
      %s292 = scalar_select %p291, %s19, 1
      %s293 = smul.addr %s292, 4
      %s294 = smul.addr %s293, 8
      %s295 = scalar_lea.vmem %s8, %s294
      %p296 = scmp.lt.s32.totalorder %s19, 1
      %s297 = scalar_select %p296, %s19, 1
      %s298 = smul.addr %s297, 4
      %s299 = smul.addr %s298, 8
      %s300 = scalar_lea.vmem %s0, %s299
      %p301 = scmp.lt.s32.totalorder %s19, 1
      %s302 = scalar_select %p301, %s19, 1
      %s303 = smul.addr %s302, 4
      %s304 = smul.addr %s303, 8
      %s305 = scalar_lea.vmem %s8, %s304
      %v307 = vld [vmem:[%s2] sm:$0x1]
      %v308 = vld [vmem:[%s2 + $0x1] sm:$0x1]
      %v309 = vld [vmem:[%s2 + $0x2] sm:$0x1]
      %v310 = vld [vmem:[%s2 + $0x3] sm:$0x1]
      %v311 = vld [vmem:[%s2 + $0x4] sm:$0x1]
      %v312 = vld [vmem:[%s2 + $0x5] sm:$0x1]
      %v313 = vld [vmem:[%s2 + $0x6] sm:$0x1]
      %v314 = vld [vmem:[%s2 + $0x7] sm:$0x1]
      %v315 = vld [vmem:[%s2 + $0x8] sm:$0x1]
      %v316 = vld [vmem:[%s300] sm:$0xff]
      %v317 = vld [vmem:[%s300 + $0x8] sm:$0xff]
      %v318 = vld [vmem:[%s300 + $0x10] sm:$0xff]
      %v319 = vld [vmem:[%s300 + $0x18] sm:$0xff]
      %v320 = vpack.c.bf16 %v317, %v316
      %v321 = vpack.c.bf16 %v319, %v318
      %v322 = vld [vmem:[%s3] sm:$0xf]
      %v323 = vld [vmem:[%s3 + $0x4] sm:$0xf]
      %v324 = vld [vmem:[%s3 + $0x8] sm:$0xf]
      %v325 = vld [vmem:[%s3 + $0xc] sm:$0xf]
      %v326 = vld [vmem:[%s3 + $0x10] sm:$0xf]
      %v327 = vld [vmem:[%s3 + $0x14] sm:$0xf]
      %v328 = vld [vmem:[%s3 + $0x18] sm:$0xf]
      %v329 = vld [vmem:[%s3 + $0x1c] sm:$0xf]
      %v330 = vld [vmem:[%s3 + $0x20] sm:$0xf]
      %v331 = vld [vmem:[%s3 + $0x24] sm:$0xf]
      %v332 = vld [vmem:[%s3 + $0x28] sm:$0xf]
      %v333 = vld [vmem:[%s3 + $0x2c] sm:$0xf]
      %v334 = vlaneseq
      %v335 = vshrl.u32 %v334, 7
      %v336 = vsub.s32 0, %v335
      %v337 = vrot.slane %v307, %v336
      %v350 = vunpack.c.l.b16 %v322
      %v351 = vunpack.c.l.b16 %v323
      %v352 = vunpack.c.l.b16 %v324
      %v353 = vunpack.c.l.b16 %v325
      %v354 = vunpack.c.l.b16 %v326
      %v355 = vunpack.c.l.b16 %v327
      %v356 = vunpack.c.l.b16 %v328
      %v357 = vunpack.c.l.b16 %v329
      %v358 = vunpack.c.l.b16 %v330
      %v359 = vunpack.c.l.b16 %v331
      %v360 = vunpack.c.l.b16 %v332
      %v361 = vunpack.c.l.b16 %v333
      %v362 = vpack.c.b16 %v351, %v350
      %v363 = vpack.c.b16 %v353, %v352
      %v364 = vpack.c.b16 %v355, %v354
      %v365 = vpack.c.b16 %v357, %v356
      %v366 = vpack.c.b16 %v359, %v358
      %v367 = vpack.c.b16 %v361, %v360
      %vm374 = vcmask 785408
      %v376 = vsel %vm374, %v320, 0
      %v379 = vsel %vm374, %v321, 0
      %381 = vmatprep.subr.bf16.mxu0 0
      %382 = vmatpush1.bf16.msra.mxu0 0
      %383 = vmatprep.subr.bf16.mxu0 0
      %384 = vmatpush1.bf16.msra.mxu0 0
      %385 = vmatprep.subr.bf16.mxu0 0
      %386 = vmatpush1.bf16.msra.mxu0 %v367
      %387 = vmatprep.subr.bf16.mxu0 0
      %388 = vmatpush1.bf16.msra.mxu0 %v366
      %389 = vmatprep.subr.bf16.mxu0 0
      %390 = vmatpush1.bf16.msra.mxu0 %v365
      %391 = vmatprep.subr.bf16.mxu0 0
      %392 = vmatpush1.bf16.msra.mxu0 %v364
      %393 = vmatprep.subr.bf16.mxu0 0
      %394 = vmatpush1.bf16.msra.mxu0 %v363
      %395 = vmatprep.subr.bf16.mxu0 0
      %396 = vmatpush1.bf16.msra.mxu0 %v362
      %397 = vmatprep.subr.bf16.mxu0 0
      %398 = vmatpush2.bf16.msra.mxu0 0
      %399 = vmatprep.subr.bf16.mxu0 0
      %400 = vmatpush2.bf16.msra.mxu0 0
      %401 = vmatprep.subr.bf16.mxu0 0
      %402 = vmatpush2.bf16.msra.mxu0 0
      %403 = vmatprep.subr.bf16.mxu0 0
      %404 = vmatpush2.bf16.msra.mxu0 0
      %405 = vmatprep.subr.bf16.mxu0 0
      %406 = vmatpush2.bf16.msra.mxu0 0
      %407 = vmatprep.subr.bf16.mxu0 0
      %408 = vmatpush2.bf16.msra.mxu0 0
      %409 = vmatprep.subr.bf16.mxu0 0
      %410 = vmatpush2.bf16.msra.mxu0 0
      %411 = vmatprep.subr.bf16.mxu0 0
      %412 = vmatpush2.bf16.msra.mxu0 0
      %413 = vmatprep.mubr.bf16.mxu0 0
      %414 = vmatmul.mubr.bf16.gmra.mxu0 %v376
      %v415 = vpop.f32.mrf.mxu0
      %v416 = vadd.f32 %v337, %v415
      %v417 = vpop.f32.mrf.mxu0
      %v418 = vpop.f32.mrf.mxu0
      %v419 = vadd.f32 %v337, %v418
      %v420 = vpop.f32.mrf.mxu0
      %421 = vmatprep.mubr.bf16.mxu0 0
      %422 = vmatmul.mubr.bf16.gmra.mxu0 %v379
      %v423 = vpop.f32.mrf.mxu0
      %v424 = vadd.f32 %v337, %v423
      %v425 = vpop.f32.mrf.mxu0
      %v426 = vpop.f32.mrf.mxu0
      %v427 = vadd.f32 %v337, %v426
      %v428 = vpop.f32.mrf.mxu0
      %429 = vdwg.mxu0
      %v430 = vld [vmem:[%s1] sm:$0xff]
      %v431 = vld [vmem:[%s1 + $0x8] sm:$0xff]
      %v432 = vld [vmem:[%s1 + $0x10] sm:$0xff]
      %v433 = vld [vmem:[%s1 + $0x18] sm:$0xff]
      %v434 = vadd.f32 %v416, %v430
      %v435 = vadd.f32 %v419, %v431
      %v436 = vadd.f32 %v424, %v432
      %v437 = vadd.f32 %v427, %v433
      %vm438 = vcmask 261120
      %v439 = vsel %vm438, %v434, 0.0
      %440 = vadd.xlane.f32.xlu0 %v439
      %v441 = vpop.xlane.xlu0 %440
      %v442 = vsel %vm438, %v435, 0.0
      %443 = vadd.xlane.f32.xlu0 %v442
      %v444 = vpop.xlane.xlu0 %443
      %v445 = vsel %vm438, %v436, 0.0
      %446 = vadd.xlane.f32.xlu0 %v445
      %v447 = vpop.xlane.xlu0 %446
      %v448 = vsel %vm438, %v437, 0.0
      %449 = vadd.xlane.f32.xlu0 %v448
      %v450 = vpop.xlane.xlu0 %449
      %v451 = vrcp.pop 32.0
      %v452 = vmul.f32 %v441, %v451
      %v453 = vmul.f32 %v444, %v451
      %v454 = vmul.f32 %v447, %v451
      %v455 = vmul.f32 %v450, %v451
      %v456 = vsub.f32 %v434, %v452
      %v457 = vsub.f32 %v435, %v453
      %v458 = vsub.f32 %v436, %v454
      %v459 = vsub.f32 %v437, %v455
      %v460 = vmul.f32 %v456, %v456
      %v461 = vmul.f32 %v457, %v457
      %v462 = vmul.f32 %v458, %v458
      %v463 = vmul.f32 %v459, %v459
      %v464 = vsel %vm438, %v460, 0.0
      %465 = vadd.xlane.f32.xlu0 %v464
      %v466 = vpop.xlane.xlu0 %465
      %v467 = vsel %vm438, %v461, 0.0
      %468 = vadd.xlane.f32.xlu0 %v467
      %v469 = vpop.xlane.xlu0 %468
      %v470 = vsel %vm438, %v462, 0.0
      %471 = vadd.xlane.f32.xlu0 %v470
      %v472 = vpop.xlane.xlu0 %471
      %v473 = vsel %vm438, %v463, 0.0
      %474 = vadd.xlane.f32.xlu0 %v473
      %v475 = vpop.xlane.xlu0 %474
      %v476 = vmul.f32 %v466, %v451
      %v477 = vmul.f32 %v469, %v451
      %v478 = vmul.f32 %v472, %v451
      %v479 = vmul.f32 %v475, %v451
      %v480 = vadd.f32 %v476, 1e-05
      %v481 = vadd.f32 %v477, 1e-05
      %v482 = vadd.f32 %v478, 1e-05
      %v483 = vadd.f32 %v479, 1e-05
      %v484 = vrsqrt.pop %v480
      %v485 = vrsqrt.pop %v481
      %v486 = vrsqrt.pop %v482
      %v487 = vrsqrt.pop %v483
      %v488 = vmul.f32 %v456, %v484
      %v489 = vmul.f32 %v457, %v485
      %v490 = vmul.f32 %v458, %v486
      %v491 = vmul.f32 %v459, %v487
      %v492 = vlaneseq
      %v493 = vshrl.u32 %v492, 7
      %v494 = vsub.s32 0, %v493
      %v495 = vrot.slane %v308, %v494
      %v496 = vmul.f32 %v488, %v495
      %v497 = vmul.f32 %v489, %v495
      %v498 = vmul.f32 %v490, %v495
      %v499 = vmul.f32 %v491, %v495
      %v500 = vlaneseq
      %v501 = vshrl.u32 %v500, 7
      %v502 = vsub.s32 0, %v501
      %v503 = vrot.slane %v309, %v502
      %v504 = vadd.f32 %v496, %v503
      %v505 = vadd.f32 %v497, %v503
      %v506 = vadd.f32 %v498, %v503
      %v507 = vadd.f32 %v499, %v503
      %v508 = vpack.c.bf16 %v505, %v504
      %v509 = vpack.c.bf16 %v507, %v506
      %v510 = vld [vmem:[%s4] sm:$0xf]
      %v511 = vld [vmem:[%s4 + $0x4] sm:$0xf]
      %v512 = vld [vmem:[%s4 + $0x8] sm:$0xf]
      %v513 = vld [vmem:[%s4 + $0xc] sm:$0xf]
      %v514 = vlaneseq
      %v515 = vshrl.u32 %v514, 7
      %v516 = vsub.s32 0, %v515
      %v517 = vrot.slane %v310, %v516
      %v522 = vunpack.c.l.b16 %v510
      %v523 = vunpack.c.l.b16 %v511
      %v524 = vunpack.c.l.b16 %v512
      %v525 = vunpack.c.l.b16 %v513
      %v526 = vpack.c.b16 %v523, %v522
      %v527 = vpack.c.b16 %v525, %v524
      %v531 = vsel %vm438, %v508, 0
      %v534 = vsel %vm438, %v509, 0
      %536 = vmatprep.subr.bf16.mxu0 0
      %537 = vmatpush1.bf16.msra.mxu0 0
      %538 = vmatprep.subr.bf16.mxu0 0
      %539 = vmatpush1.bf16.msra.mxu0 0
      %540 = vmatprep.subr.bf16.mxu0 0
      %541 = vmatpush1.bf16.msra.mxu0 0
      %542 = vmatprep.subr.bf16.mxu0 0
      %543 = vmatpush1.bf16.msra.mxu0 0
      %544 = vmatprep.subr.bf16.mxu0 0
      %545 = vmatpush1.bf16.msra.mxu0 0
      %546 = vmatprep.subr.bf16.mxu0 0
      %547 = vmatpush1.bf16.msra.mxu0 0
      %548 = vmatprep.subr.bf16.mxu0 0
      %549 = vmatpush1.bf16.msra.mxu0 %v527
      %550 = vmatprep.subr.bf16.mxu0 0
      %551 = vmatpush1.bf16.msra.mxu0 %v526
      %552 = vmatprep.subr.bf16.mxu0 0
      %553 = vmatpush2.bf16.msra.mxu0 0
      %554 = vmatprep.subr.bf16.mxu0 0
      %555 = vmatpush2.bf16.msra.mxu0 0
      %556 = vmatprep.subr.bf16.mxu0 0
      %557 = vmatpush2.bf16.msra.mxu0 0
      %558 = vmatprep.subr.bf16.mxu0 0
      %559 = vmatpush2.bf16.msra.mxu0 0
      %560 = vmatprep.subr.bf16.mxu0 0
      %561 = vmatpush2.bf16.msra.mxu0 0
      %562 = vmatprep.subr.bf16.mxu0 0
      %563 = vmatpush2.bf16.msra.mxu0 0
      %564 = vmatprep.subr.bf16.mxu0 0
      %565 = vmatpush2.bf16.msra.mxu0 0
      %566 = vmatprep.subr.bf16.mxu0 0
      %567 = vmatpush2.bf16.msra.mxu0 0
      %568 = vmatprep.mubr.bf16.mxu0 0
      %569 = vmatmul.mubr.bf16.gmra.mxu0 %v531
      %v570 = vpop.f32.mrf.mxu0
      %v571 = vadd.f32 %v517, %v570
      %v572 = vpop.f32.mrf.mxu0
      %v573 = vpop.f32.mrf.mxu0
      %v574 = vadd.f32 %v517, %v573
      %v575 = vpop.f32.mrf.mxu0
      %576 = vmatprep.mubr.bf16.mxu0 0
      %577 = vmatmul.mubr.bf16.gmra.mxu0 %v534
      %v578 = vpop.f32.mrf.mxu0
      %v579 = vadd.f32 %v517, %v578
      %v580 = vpop.f32.mrf.mxu0
      %v581 = vpop.f32.mrf.mxu0
      %v582 = vadd.f32 %v517, %v581
      %v583 = vpop.f32.mrf.mxu0
      %584 = vdwg.mxu0
      %v585 = vmul.f32 %v571, 0.17677669
      %v586 = vmul.f32 %v574, 0.17677669
      %v587 = vmul.f32 %v579, 0.17677669
      %v588 = vmul.f32 %v582, 0.17677669
      %v589 = vpack.c.bf16 %v586, %v585
      %v590 = vpack.c.bf16 %v588, %v587
      %v591 = vpack.c.bf16 %v574, %v571
      %v592 = vpack.c.bf16 %v582, %v579
      %595 = vrot.lane.b32.xlu0 %v591, 96
      %v596 = vpop.permute.xlu0 %595
      %597 = vrot.lane.b32.xlu0 %v592, 96
      %v598 = vpop.permute.xlu0 %597
      %vm599 = vcmask 64512
      %v601 = vsel %vm599, %v589, 0
      %v604 = vsel %vm599, %v590, 0
      %v607 = vsel %vm599, %v596, 0
      %v610 = vsel %vm599, %v598, 0
      %612 = vmatprep.subr.bf16.mxu0 0
      %613 = vmatpush1.bf16.xpose.msra.mxu0 0
      %614 = vmatprep.subr.bf16.mxu0 0
      %615 = vmatpush1.bf16.xpose.msra.mxu0 0
      %616 = vmatprep.subr.bf16.mxu0 0
      %617 = vmatpush1.bf16.xpose.msra.mxu0 0
      %618 = vmatprep.subr.bf16.mxu0 0
      %619 = vmatpush1.bf16.xpose.msra.mxu0 0
      %620 = vmatprep.subr.bf16.mxu0 0
      %621 = vmatpush1.bf16.xpose.msra.mxu0 0
      %622 = vmatprep.subr.bf16.mxu0 0
      %623 = vmatpush1.bf16.xpose.msra.mxu0 0
      %624 = vmatprep.subr.bf16.mxu0 0
      %625 = vmatpush1.bf16.xpose.msra.mxu0 %v610
      %626 = vmatprep.subr.bf16.mxu0 0
      %627 = vmatpush1.bf16.xpose.msra.mxu0 %v607
      %628 = vmatprep.subr.bf16.mxu0 0
      %629 = vmatpush2.bf16.xpose.msra.mxu0 0
      %630 = vmatprep.subr.bf16.mxu0 0
      %631 = vmatpush2.bf16.xpose.msra.mxu0 0
      %632 = vmatprep.subr.bf16.mxu0 0
      %633 = vmatpush2.bf16.xpose.msra.mxu0 0
      %634 = vmatprep.subr.bf16.mxu0 0
      %635 = vmatpush2.bf16.xpose.msra.mxu0 0
      %636 = vmatprep.subr.bf16.mxu0 0
      %637 = vmatpush2.bf16.xpose.msra.mxu0 0
      %638 = vmatprep.subr.bf16.mxu0 0
      %639 = vmatpush2.bf16.xpose.msra.mxu0 0
      %640 = vmatprep.subr.bf16.mxu0 0
      %641 = vmatpush2.bf16.xpose.msra.mxu0 0
      %642 = vmatprep.subr.bf16.mxu0 0
      %643 = vmatpush2.bf16.xpose.msra.mxu0 0
      %644 = vmatprep.mubr.bf16.mxu0 0
      %645 = vmatmul.mubr.bf16.gmra.mxu0 %v601
      %v646 = vpop.f32.mrf.mxu0
      %v647 = vadd.f32 0.0, %v646
      %v648 = vpop.f32.mrf.mxu0
      %v649 = vpop.f32.mrf.mxu0
      %v650 = vadd.f32 0.0, %v649
      %v651 = vpop.f32.mrf.mxu0
      %652 = vmatprep.mubr.bf16.mxu0 0
      %653 = vmatmul.mubr.bf16.gmra.mxu0 %v604
      %v654 = vpop.f32.mrf.mxu0
      %v655 = vadd.f32 0.0, %v654
      %v656 = vpop.f32.mrf.mxu0
      %v657 = vpop.f32.mrf.mxu0
      %v658 = vadd.f32 0.0, %v657
      %v659 = vpop.f32.mrf.mxu0
      %660 = vdwg.mxu0
      %v661 = vsel %vm438, %v647, -inf
      %662 = vmax.xlane.f32.xlu0 %v661
      %v663 = vpop.xlane.xlu0 %662
      %v664 = vsel %vm438, %v650, -inf
      %665 = vmax.xlane.f32.xlu0 %v664
      %v666 = vpop.xlane.xlu0 %665
      %v667 = vsel %vm438, %v655, -inf
      %668 = vmax.xlane.f32.xlu0 %v667
      %v669 = vpop.xlane.xlu0 %668
      %v670 = vsel %vm438, %v658, -inf
      %671 = vmax.xlane.f32.xlu0 %v670
      %v672 = vpop.xlane.xlu0 %671
      %v673 = vsub.f32 %v647, %v663
      %v674 = vsub.f32 %v650, %v666
      %v675 = vsub.f32 %v655, %v669
      %v676 = vsub.f32 %v658, %v672
      %v677 = vmul.f32 %v673, 1.442695
      %v678 = vpow.pop %v677
      %v679 = vmul.f32 %v674, 1.442695
      %v680 = vpow.pop %v679
      %v681 = vmul.f32 %v675, 1.442695
      %v682 = vpow.pop %v681
      %v683 = vmul.f32 %v676, 1.442695
      %v684 = vpow.pop %v683
      %v685 = vsel %vm438, %v678, 0.0
      %686 = vadd.xlane.f32.xlu0 %v685
      %v687 = vpop.xlane.xlu0 %686
      %v688 = vsel %vm438, %v680, 0.0
      %689 = vadd.xlane.f32.xlu0 %v688
      %v690 = vpop.xlane.xlu0 %689
      %v691 = vsel %vm438, %v682, 0.0
      %692 = vadd.xlane.f32.xlu0 %v691
      %v693 = vpop.xlane.xlu0 %692
      %v694 = vsel %vm438, %v684, 0.0
      %695 = vadd.xlane.f32.xlu0 %v694
      %v696 = vpop.xlane.xlu0 %695
      %v697 = vrcp.pop %v687
      %v698 = vrcp.pop %v690
      %v699 = vrcp.pop %v693
      %v700 = vrcp.pop %v696
      %v701 = vmul.f32 %v678, %v697
      %v702 = vmul.f32 %v680, %v698
      %v703 = vmul.f32 %v682, %v699
      %v704 = vmul.f32 %v684, %v700
      %v705 = vpack.c.bf16 %v702, %v701
      %v706 = vpack.c.bf16 %v704, %v703
      %707 = vrot.lane.b32.xlu0 %v591, 64
      %v708 = vpop.permute.xlu0 %707
      %709 = vrot.lane.b32.xlu0 %v592, 64
      %v710 = vpop.permute.xlu0 %709
      %v714 = vsel %vm438, %v705, 0
      %v717 = vsel %vm438, %v706, 0
      %719 = vmatprep.subr.bf16.mxu0 0
      %720 = vmatpush1.bf16.msra.mxu0 0
      %721 = vmatprep.subr.bf16.mxu0 0
      %722 = vmatpush1.bf16.msra.mxu0 0
      %723 = vmatprep.subr.bf16.mxu0 0
      %724 = vmatpush1.bf16.msra.mxu0 0
      %725 = vmatprep.subr.bf16.mxu0 0
      %726 = vmatpush1.bf16.msra.mxu0 0
      %727 = vmatprep.subr.bf16.mxu0 0
      %728 = vmatpush1.bf16.msra.mxu0 0
      %729 = vmatprep.subr.bf16.mxu0 0
      %730 = vmatpush1.bf16.msra.mxu0 0
      %731 = vmatprep.subr.bf16.mxu0 0
      %732 = vmatpush1.bf16.msra.mxu0 %v710
      %733 = vmatprep.subr.bf16.mxu0 0
      %734 = vmatpush1.bf16.msra.mxu0 %v708
      %735 = vmatprep.subr.bf16.mxu0 0
      %736 = vmatpush2.bf16.msra.mxu0 0
      %737 = vmatprep.subr.bf16.mxu0 0
      %738 = vmatpush2.bf16.msra.mxu0 0
      %739 = vmatprep.subr.bf16.mxu0 0
      %740 = vmatpush2.bf16.msra.mxu0 0
      %741 = vmatprep.subr.bf16.mxu0 0
      %742 = vmatpush2.bf16.msra.mxu0 0
      %743 = vmatprep.subr.bf16.mxu0 0
      %744 = vmatpush2.bf16.msra.mxu0 0
      %745 = vmatprep.subr.bf16.mxu0 0
      %746 = vmatpush2.bf16.msra.mxu0 0
      %747 = vmatprep.subr.bf16.mxu0 0
      %748 = vmatpush2.bf16.msra.mxu0 0
      %749 = vmatprep.subr.bf16.mxu0 0
      %750 = vmatpush2.bf16.msra.mxu0 0
      %751 = vmatprep.mubr.bf16.mxu0 0
      %752 = vmatmul.mubr.bf16.gmra.mxu0 %v714
      %v753 = vpop.f32.mrf.mxu0
      %v754 = vadd.f32 0.0, %v753
      %v755 = vpop.f32.mrf.mxu0
      %v756 = vpop.f32.mrf.mxu0
      %v757 = vadd.f32 0.0, %v756
      %v758 = vpop.f32.mrf.mxu0
      %759 = vmatprep.mubr.bf16.mxu0 0
      %760 = vmatmul.mubr.bf16.gmra.mxu0 %v717
      %v761 = vpop.f32.mrf.mxu0
      %v762 = vadd.f32 0.0, %v761
      %v763 = vpop.f32.mrf.mxu0
      %v764 = vpop.f32.mrf.mxu0
      %v765 = vadd.f32 0.0, %v764
      %v766 = vpop.f32.mrf.mxu0
      %767 = vdwg.mxu0
      %770 = vrot.lane.b32.xlu0 %v589, 120
      %v771 = vpop.permute.xlu0 %770
      %772 = vrot.lane.b32.xlu0 %v590, 120
      %v773 = vpop.permute.xlu0 %772
      %774 = vrot.lane.b32.xlu0 %v591, 88
      %v775 = vpop.permute.xlu0 %774
      %776 = vrot.lane.b32.xlu0 %v592, 88
      %v777 = vpop.permute.xlu0 %776
      %v779 = vsel %vm599, %v771, 0
      %v782 = vsel %vm599, %v773, 0
      %v785 = vsel %vm599, %v775, 0
      %v788 = vsel %vm599, %v777, 0
      %790 = vmatprep.subr.bf16.mxu0 0
      %791 = vmatpush1.bf16.xpose.msra.mxu0 0
      %792 = vmatprep.subr.bf16.mxu0 0
      %793 = vmatpush1.bf16.xpose.msra.mxu0 0
      %794 = vmatprep.subr.bf16.mxu0 0
      %795 = vmatpush1.bf16.xpose.msra.mxu0 0
      %796 = vmatprep.subr.bf16.mxu0 0
      %797 = vmatpush1.bf16.xpose.msra.mxu0 0
      %798 = vmatprep.subr.bf16.mxu0 0
      %799 = vmatpush1.bf16.xpose.msra.mxu0 0
      %800 = vmatprep.subr.bf16.mxu0 0
      %801 = vmatpush1.bf16.xpose.msra.mxu0 0
      %802 = vmatprep.subr.bf16.mxu0 0
      %803 = vmatpush1.bf16.xpose.msra.mxu0 %v788
      %804 = vmatprep.subr.bf16.mxu0 0
      %805 = vmatpush1.bf16.xpose.msra.mxu0 %v785
      %806 = vmatprep.subr.bf16.mxu0 0
      %807 = vmatpush2.bf16.xpose.msra.mxu0 0
      %808 = vmatprep.subr.bf16.mxu0 0
      %809 = vmatpush2.bf16.xpose.msra.mxu0 0
      %810 = vmatprep.subr.bf16.mxu0 0
      %811 = vmatpush2.bf16.xpose.msra.mxu0 0
      %812 = vmatprep.subr.bf16.mxu0 0
      %813 = vmatpush2.bf16.xpose.msra.mxu0 0
      %814 = vmatprep.subr.bf16.mxu0 0
      %815 = vmatpush2.bf16.xpose.msra.mxu0 0
      %816 = vmatprep.subr.bf16.mxu0 0
      %817 = vmatpush2.bf16.xpose.msra.mxu0 0
      %818 = vmatprep.subr.bf16.mxu0 0
      %819 = vmatpush2.bf16.xpose.msra.mxu0 0
      %820 = vmatprep.subr.bf16.mxu0 0
      %821 = vmatpush2.bf16.xpose.msra.mxu0 0
      %822 = vmatprep.mubr.bf16.mxu0 0
      %823 = vmatmul.mubr.bf16.gmra.mxu0 %v779
      %v824 = vpop.f32.mrf.mxu0
      %v825 = vadd.f32 0.0, %v824
      %v826 = vpop.f32.mrf.mxu0
      %v827 = vpop.f32.mrf.mxu0
      %v828 = vadd.f32 0.0, %v827
      %v829 = vpop.f32.mrf.mxu0
      %830 = vmatprep.mubr.bf16.mxu0 0
      %831 = vmatmul.mubr.bf16.gmra.mxu0 %v782
      %v832 = vpop.f32.mrf.mxu0
      %v833 = vadd.f32 0.0, %v832
      %v834 = vpop.f32.mrf.mxu0
      %v835 = vpop.f32.mrf.mxu0
      %v836 = vadd.f32 0.0, %v835
      %v837 = vpop.f32.mrf.mxu0
      %838 = vdwg.mxu0
      %v839 = vsel %vm438, %v825, -inf
      %840 = vmax.xlane.f32.xlu0 %v839
      %v841 = vpop.xlane.xlu0 %840
      %v842 = vsel %vm438, %v828, -inf
      %843 = vmax.xlane.f32.xlu0 %v842
      %v844 = vpop.xlane.xlu0 %843
      %v845 = vsel %vm438, %v833, -inf
      %846 = vmax.xlane.f32.xlu0 %v845
      %v847 = vpop.xlane.xlu0 %846
      %v848 = vsel %vm438, %v836, -inf
      %849 = vmax.xlane.f32.xlu0 %v848
      %v850 = vpop.xlane.xlu0 %849
      %v851 = vsub.f32 %v825, %v841
      %v852 = vsub.f32 %v828, %v844
      %v853 = vsub.f32 %v833, %v847
      %v854 = vsub.f32 %v836, %v850
      %v855 = vmul.f32 %v851, 1.442695
      %v856 = vpow.pop %v855
      %v857 = vmul.f32 %v852, 1.442695
      %v858 = vpow.pop %v857
      %v859 = vmul.f32 %v853, 1.442695
      %v860 = vpow.pop %v859
      %v861 = vmul.f32 %v854, 1.442695
      %v862 = vpow.pop %v861
      %v863 = vsel %vm438, %v856, 0.0
      %864 = vadd.xlane.f32.xlu0 %v863
      %v865 = vpop.xlane.xlu0 %864
      %v866 = vsel %vm438, %v858, 0.0
      %867 = vadd.xlane.f32.xlu0 %v866
      %v868 = vpop.xlane.xlu0 %867
      %v869 = vsel %vm438, %v860, 0.0
      %870 = vadd.xlane.f32.xlu0 %v869
      %v871 = vpop.xlane.xlu0 %870
      %v872 = vsel %vm438, %v862, 0.0
      %873 = vadd.xlane.f32.xlu0 %v872
      %v874 = vpop.xlane.xlu0 %873
      %v875 = vrcp.pop %v865
      %v876 = vrcp.pop %v868
      %v877 = vrcp.pop %v871
      %v878 = vrcp.pop %v874
      %v879 = vmul.f32 %v856, %v875
      %v880 = vmul.f32 %v858, %v876
      %v881 = vmul.f32 %v860, %v877
      %v882 = vmul.f32 %v862, %v878
      %v883 = vpack.c.bf16 %v880, %v879
      %v884 = vpack.c.bf16 %v882, %v881
      %885 = vrot.lane.b32.xlu0 %v591, 56
      %v886 = vpop.permute.xlu0 %885
      %887 = vrot.lane.b32.xlu0 %v592, 56
      %v888 = vpop.permute.xlu0 %887
      %v892 = vsel %vm438, %v883, 0
      %v895 = vsel %vm438, %v884, 0
      %897 = vmatprep.subr.bf16.mxu0 0
      %898 = vmatpush1.bf16.msra.mxu0 0
      %899 = vmatprep.subr.bf16.mxu0 0
      %900 = vmatpush1.bf16.msra.mxu0 0
      %901 = vmatprep.subr.bf16.mxu0 0
      %902 = vmatpush1.bf16.msra.mxu0 0
      %903 = vmatprep.subr.bf16.mxu0 0
      %904 = vmatpush1.bf16.msra.mxu0 0
      %905 = vmatprep.subr.bf16.mxu0 0
      %906 = vmatpush1.bf16.msra.mxu0 0
      %907 = vmatprep.subr.bf16.mxu0 0
      %908 = vmatpush1.bf16.msra.mxu0 0
      %909 = vmatprep.subr.bf16.mxu0 0
      %910 = vmatpush1.bf16.msra.mxu0 %v888
      %911 = vmatprep.subr.bf16.mxu0 0
      %912 = vmatpush1.bf16.msra.mxu0 %v886
      %913 = vmatprep.subr.bf16.mxu0 0
      %914 = vmatpush2.bf16.msra.mxu0 0
      %915 = vmatprep.subr.bf16.mxu0 0
      %916 = vmatpush2.bf16.msra.mxu0 0
      %917 = vmatprep.subr.bf16.mxu0 0
      %918 = vmatpush2.bf16.msra.mxu0 0
      %919 = vmatprep.subr.bf16.mxu0 0
      %920 = vmatpush2.bf16.msra.mxu0 0
      %921 = vmatprep.subr.bf16.mxu0 0
      %922 = vmatpush2.bf16.msra.mxu0 0
      %923 = vmatprep.subr.bf16.mxu0 0
      %924 = vmatpush2.bf16.msra.mxu0 0
      %925 = vmatprep.subr.bf16.mxu0 0
      %926 = vmatpush2.bf16.msra.mxu0 0
      %927 = vmatprep.subr.bf16.mxu0 0
      %928 = vmatpush2.bf16.msra.mxu0 0
      %929 = vmatprep.mubr.bf16.mxu0 0
      %930 = vmatmul.mubr.bf16.gmra.mxu0 %v892
      %v931 = vpop.f32.mrf.mxu0
      %v932 = vadd.f32 0.0, %v931
      %v933 = vpop.f32.mrf.mxu0
      %v934 = vpop.f32.mrf.mxu0
      %v935 = vadd.f32 0.0, %v934
      %v936 = vpop.f32.mrf.mxu0
      %937 = vmatprep.mubr.bf16.mxu0 0
      %938 = vmatmul.mubr.bf16.gmra.mxu0 %v895
      %v939 = vpop.f32.mrf.mxu0
      %v940 = vadd.f32 0.0, %v939
      %v941 = vpop.f32.mrf.mxu0
      %v942 = vpop.f32.mrf.mxu0
      %v943 = vadd.f32 0.0, %v942
      %v944 = vpop.f32.mrf.mxu0
      %945 = vdwg.mxu0
      %946 = vrot.lane.b32.xlu0 %v589, 112
      %v947 = vpop.permute.xlu0 %946
      %948 = vrot.lane.b32.xlu0 %v590, 112
      %v949 = vpop.permute.xlu0 %948
      %950 = vrot.lane.b32.xlu0 %v591, 80
      %v951 = vpop.permute.xlu0 %950
      %952 = vrot.lane.b32.xlu0 %v592, 80
      %v953 = vpop.permute.xlu0 %952
      %v955 = vsel %vm599, %v947, 0
      %v958 = vsel %vm599, %v949, 0
      %v961 = vsel %vm599, %v951, 0
      %v964 = vsel %vm599, %v953, 0
      %966 = vmatprep.subr.bf16.mxu0 0
      %967 = vmatpush1.bf16.xpose.msra.mxu0 0
      %968 = vmatprep.subr.bf16.mxu0 0
      %969 = vmatpush1.bf16.xpose.msra.mxu0 0
      %970 = vmatprep.subr.bf16.mxu0 0
      %971 = vmatpush1.bf16.xpose.msra.mxu0 0
      %972 = vmatprep.subr.bf16.mxu0 0
      %973 = vmatpush1.bf16.xpose.msra.mxu0 0
      %974 = vmatprep.subr.bf16.mxu0 0
      %975 = vmatpush1.bf16.xpose.msra.mxu0 0
      %976 = vmatprep.subr.bf16.mxu0 0
      %977 = vmatpush1.bf16.xpose.msra.mxu0 0
      %978 = vmatprep.subr.bf16.mxu0 0
      %979 = vmatpush1.bf16.xpose.msra.mxu0 %v964
      %980 = vmatprep.subr.bf16.mxu0 0
      %981 = vmatpush1.bf16.xpose.msra.mxu0 %v961
      %982 = vmatprep.subr.bf16.mxu0 0
      %983 = vmatpush2.bf16.xpose.msra.mxu0 0
      %984 = vmatprep.subr.bf16.mxu0 0
      %985 = vmatpush2.bf16.xpose.msra.mxu0 0
      %986 = vmatprep.subr.bf16.mxu0 0
      %987 = vmatpush2.bf16.xpose.msra.mxu0 0
      %988 = vmatprep.subr.bf16.mxu0 0
      %989 = vmatpush2.bf16.xpose.msra.mxu0 0
      %990 = vmatprep.subr.bf16.mxu0 0
      %991 = vmatpush2.bf16.xpose.msra.mxu0 0
      %992 = vmatprep.subr.bf16.mxu0 0
      %993 = vmatpush2.bf16.xpose.msra.mxu0 0
      %994 = vmatprep.subr.bf16.mxu0 0
      %995 = vmatpush2.bf16.xpose.msra.mxu0 0
      %996 = vmatprep.subr.bf16.mxu0 0
      %997 = vmatpush2.bf16.xpose.msra.mxu0 0
      %998 = vmatprep.mubr.bf16.mxu0 0
      %999 = vmatmul.mubr.bf16.gmra.mxu0 %v955
      %v1000 = vpop.f32.mrf.mxu0
      %v1001 = vadd.f32 0.0, %v1000
      %v1002 = vpop.f32.mrf.mxu0
      %v1003 = vpop.f32.mrf.mxu0
      %v1004 = vadd.f32 0.0, %v1003
      %v1005 = vpop.f32.mrf.mxu0
      %1006 = vmatprep.mubr.bf16.mxu0 0
      %1007 = vmatmul.mubr.bf16.gmra.mxu0 %v958
      %v1008 = vpop.f32.mrf.mxu0
      %v1009 = vadd.f32 0.0, %v1008
      %v1010 = vpop.f32.mrf.mxu0
      %v1011 = vpop.f32.mrf.mxu0
      %v1012 = vadd.f32 0.0, %v1011
      %v1013 = vpop.f32.mrf.mxu0
      %1014 = vdwg.mxu0
      %v1015 = vsel %vm438, %v1001, -inf
      %1016 = vmax.xlane.f32.xlu0 %v1015
      %v1017 = vpop.xlane.xlu0 %1016
      %v1018 = vsel %vm438, %v1004, -inf
      %1019 = vmax.xlane.f32.xlu0 %v1018
      %v1020 = vpop.xlane.xlu0 %1019
      %v1021 = vsel %vm438, %v1009, -inf
      %1022 = vmax.xlane.f32.xlu0 %v1021
      %v1023 = vpop.xlane.xlu0 %1022
      %v1024 = vsel %vm438, %v1012, -inf
      %1025 = vmax.xlane.f32.xlu0 %v1024
      %v1026 = vpop.xlane.xlu0 %1025
      %v1027 = vsub.f32 %v1001, %v1017
      %v1028 = vsub.f32 %v1004, %v1020
      %v1029 = vsub.f32 %v1009, %v1023
      %v1030 = vsub.f32 %v1012, %v1026
      %v1031 = vmul.f32 %v1027, 1.442695
      %v1032 = vpow.pop %v1031
      %v1033 = vmul.f32 %v1028, 1.442695
      %v1034 = vpow.pop %v1033
      %v1035 = vmul.f32 %v1029, 1.442695
      %v1036 = vpow.pop %v1035
      %v1037 = vmul.f32 %v1030, 1.442695
      %v1038 = vpow.pop %v1037
      %v1039 = vsel %vm438, %v1032, 0.0
      %1040 = vadd.xlane.f32.xlu0 %v1039
      %v1041 = vpop.xlane.xlu0 %1040
      %v1042 = vsel %vm438, %v1034, 0.0
      %1043 = vadd.xlane.f32.xlu0 %v1042
      %v1044 = vpop.xlane.xlu0 %1043
      %v1045 = vsel %vm438, %v1036, 0.0
      %1046 = vadd.xlane.f32.xlu0 %v1045
      %v1047 = vpop.xlane.xlu0 %1046
      %v1048 = vsel %vm438, %v1038, 0.0
      %1049 = vadd.xlane.f32.xlu0 %v1048
      %v1050 = vpop.xlane.xlu0 %1049
      %v1051 = vrcp.pop %v1041
      %v1052 = vrcp.pop %v1044
      %v1053 = vrcp.pop %v1047
      %v1054 = vrcp.pop %v1050
      %v1055 = vmul.f32 %v1032, %v1051
      %v1056 = vmul.f32 %v1034, %v1052
      %v1057 = vmul.f32 %v1036, %v1053
      %v1058 = vmul.f32 %v1038, %v1054
      %v1059 = vpack.c.bf16 %v1056, %v1055
      %v1060 = vpack.c.bf16 %v1058, %v1057
      %1061 = vrot.lane.b32.xlu0 %v591, 48
      %v1062 = vpop.permute.xlu0 %1061
      %1063 = vrot.lane.b32.xlu0 %v592, 48
      %v1064 = vpop.permute.xlu0 %1063
      %v1068 = vsel %vm438, %v1059, 0
      %v1071 = vsel %vm438, %v1060, 0
      %1073 = vmatprep.subr.bf16.mxu0 0
      %1074 = vmatpush1.bf16.msra.mxu0 0
      %1075 = vmatprep.subr.bf16.mxu0 0
      %1076 = vmatpush1.bf16.msra.mxu0 0
      %1077 = vmatprep.subr.bf16.mxu0 0
      %1078 = vmatpush1.bf16.msra.mxu0 0
      %1079 = vmatprep.subr.bf16.mxu0 0
      %1080 = vmatpush1.bf16.msra.mxu0 0
      %1081 = vmatprep.subr.bf16.mxu0 0
      %1082 = vmatpush1.bf16.msra.mxu0 0
      %1083 = vmatprep.subr.bf16.mxu0 0
      %1084 = vmatpush1.bf16.msra.mxu0 0
      %1085 = vmatprep.subr.bf16.mxu0 0
      %1086 = vmatpush1.bf16.msra.mxu0 %v1064
      %1087 = vmatprep.subr.bf16.mxu0 0
      %1088 = vmatpush1.bf16.msra.mxu0 %v1062
      %1089 = vmatprep.subr.bf16.mxu0 0
      %1090 = vmatpush2.bf16.msra.mxu0 0
      %1091 = vmatprep.subr.bf16.mxu0 0
      %1092 = vmatpush2.bf16.msra.mxu0 0
      %1093 = vmatprep.subr.bf16.mxu0 0
      %1094 = vmatpush2.bf16.msra.mxu0 0
      %1095 = vmatprep.subr.bf16.mxu0 0
      %1096 = vmatpush2.bf16.msra.mxu0 0
      %1097 = vmatprep.subr.bf16.mxu0 0
      %1098 = vmatpush2.bf16.msra.mxu0 0
      %1099 = vmatprep.subr.bf16.mxu0 0
      %1100 = vmatpush2.bf16.msra.mxu0 0
      %1101 = vmatprep.subr.bf16.mxu0 0
      %1102 = vmatpush2.bf16.msra.mxu0 0
      %1103 = vmatprep.subr.bf16.mxu0 0
      %1104 = vmatpush2.bf16.msra.mxu0 0
      %1105 = vmatprep.mubr.bf16.mxu0 0
      %1106 = vmatmul.mubr.bf16.gmra.mxu0 %v1068
      %v1107 = vpop.f32.mrf.mxu0
      %v1108 = vadd.f32 0.0, %v1107
      %v1109 = vpop.f32.mrf.mxu0
      %v1110 = vpop.f32.mrf.mxu0
      %v1111 = vadd.f32 0.0, %v1110
      %v1112 = vpop.f32.mrf.mxu0
      %1113 = vmatprep.mubr.bf16.mxu0 0
      %1114 = vmatmul.mubr.bf16.gmra.mxu0 %v1071
      %v1115 = vpop.f32.mrf.mxu0
      %v1116 = vadd.f32 0.0, %v1115
      %v1117 = vpop.f32.mrf.mxu0
      %v1118 = vpop.f32.mrf.mxu0
      %v1119 = vadd.f32 0.0, %v1118
      %v1120 = vpop.f32.mrf.mxu0
      %1121 = vdwg.mxu0
      %1122 = vrot.lane.b32.xlu0 %v589, 104
      %v1123 = vpop.permute.xlu0 %1122
      %1124 = vrot.lane.b32.xlu0 %v590, 104
      %v1125 = vpop.permute.xlu0 %1124
      %1126 = vrot.lane.b32.xlu0 %v591, 72
      %v1127 = vpop.permute.xlu0 %1126
      %1128 = vrot.lane.b32.xlu0 %v592, 72
      %v1129 = vpop.permute.xlu0 %1128
      %v1131 = vsel %vm599, %v1123, 0
      %v1134 = vsel %vm599, %v1125, 0
      %v1137 = vsel %vm599, %v1127, 0
      %v1140 = vsel %vm599, %v1129, 0
      %1142 = vmatprep.subr.bf16.mxu0 0
      %1143 = vmatpush1.bf16.xpose.msra.mxu0 0
      %1144 = vmatprep.subr.bf16.mxu0 0
      %1145 = vmatpush1.bf16.xpose.msra.mxu0 0
      %1146 = vmatprep.subr.bf16.mxu0 0
      %1147 = vmatpush1.bf16.xpose.msra.mxu0 0
      %1148 = vmatprep.subr.bf16.mxu0 0
      %1149 = vmatpush1.bf16.xpose.msra.mxu0 0
      %1150 = vmatprep.subr.bf16.mxu0 0
      %1151 = vmatpush1.bf16.xpose.msra.mxu0 0
      %1152 = vmatprep.subr.bf16.mxu0 0
      %1153 = vmatpush1.bf16.xpose.msra.mxu0 0
      %1154 = vmatprep.subr.bf16.mxu0 0
      %1155 = vmatpush1.bf16.xpose.msra.mxu0 %v1140
      %1156 = vmatprep.subr.bf16.mxu0 0
      %1157 = vmatpush1.bf16.xpose.msra.mxu0 %v1137
      %1158 = vmatprep.subr.bf16.mxu0 0
      %1159 = vmatpush2.bf16.xpose.msra.mxu0 0
      %1160 = vmatprep.subr.bf16.mxu0 0
      %1161 = vmatpush2.bf16.xpose.msra.mxu0 0
      %1162 = vmatprep.subr.bf16.mxu0 0
      %1163 = vmatpush2.bf16.xpose.msra.mxu0 0
      %1164 = vmatprep.subr.bf16.mxu0 0
      %1165 = vmatpush2.bf16.xpose.msra.mxu0 0
      %1166 = vmatprep.subr.bf16.mxu0 0
      %1167 = vmatpush2.bf16.xpose.msra.mxu0 0
      %1168 = vmatprep.subr.bf16.mxu0 0
      %1169 = vmatpush2.bf16.xpose.msra.mxu0 0
      %1170 = vmatprep.subr.bf16.mxu0 0
      %1171 = vmatpush2.bf16.xpose.msra.mxu0 0
      %1172 = vmatprep.subr.bf16.mxu0 0
      %1173 = vmatpush2.bf16.xpose.msra.mxu0 0
      %1174 = vmatprep.mubr.bf16.mxu0 0
      %1175 = vmatmul.mubr.bf16.gmra.mxu0 %v1131
      %v1176 = vpop.f32.mrf.mxu0
      %v1177 = vadd.f32 0.0, %v1176
      %v1178 = vpop.f32.mrf.mxu0
      %v1179 = vpop.f32.mrf.mxu0
      %v1180 = vadd.f32 0.0, %v1179
      %v1181 = vpop.f32.mrf.mxu0
      %1182 = vmatprep.mubr.bf16.mxu0 0
      %1183 = vmatmul.mubr.bf16.gmra.mxu0 %v1134
      %v1184 = vpop.f32.mrf.mxu0
      %v1185 = vadd.f32 0.0, %v1184
      %v1186 = vpop.f32.mrf.mxu0
      %v1187 = vpop.f32.mrf.mxu0
      %v1188 = vadd.f32 0.0, %v1187
      %v1189 = vpop.f32.mrf.mxu0
      %1190 = vdwg.mxu0
      %v1191 = vsel %vm438, %v1177, -inf
      %1192 = vmax.xlane.f32.xlu0 %v1191
      %v1193 = vpop.xlane.xlu0 %1192
      %v1194 = vsel %vm438, %v1180, -inf
      %1195 = vmax.xlane.f32.xlu0 %v1194
      %v1196 = vpop.xlane.xlu0 %1195
      %v1197 = vsel %vm438, %v1185, -inf
      %1198 = vmax.xlane.f32.xlu0 %v1197
      %v1199 = vpop.xlane.xlu0 %1198
      %v1200 = vsel %vm438, %v1188, -inf
      %1201 = vmax.xlane.f32.xlu0 %v1200
      %v1202 = vpop.xlane.xlu0 %1201
      %v1203 = vsub.f32 %v1177, %v1193
      %v1204 = vsub.f32 %v1180, %v1196
      %v1205 = vsub.f32 %v1185, %v1199
      %v1206 = vsub.f32 %v1188, %v1202
      %v1207 = vmul.f32 %v1203, 1.442695
      %v1208 = vpow.pop %v1207
      %v1209 = vmul.f32 %v1204, 1.442695
      %v1210 = vpow.pop %v1209
      %v1211 = vmul.f32 %v1205, 1.442695
      %v1212 = vpow.pop %v1211
      %v1213 = vmul.f32 %v1206, 1.442695
      %v1214 = vpow.pop %v1213
      %v1215 = vsel %vm438, %v1208, 0.0
      %1216 = vadd.xlane.f32.xlu0 %v1215
      %v1217 = vpop.xlane.xlu0 %1216
      %v1218 = vsel %vm438, %v1210, 0.0
      %1219 = vadd.xlane.f32.xlu0 %v1218
      %v1220 = vpop.xlane.xlu0 %1219
      %v1221 = vsel %vm438, %v1212, 0.0
      %1222 = vadd.xlane.f32.xlu0 %v1221
      %v1223 = vpop.xlane.xlu0 %1222
      %v1224 = vsel %vm438, %v1214, 0.0
      %1225 = vadd.xlane.f32.xlu0 %v1224
      %v1226 = vpop.xlane.xlu0 %1225
      %v1227 = vrcp.pop %v1217
      %v1228 = vrcp.pop %v1220
      %v1229 = vrcp.pop %v1223
      %v1230 = vrcp.pop %v1226
      %v1231 = vmul.f32 %v1208, %v1227
      %v1232 = vmul.f32 %v1210, %v1228
      %v1233 = vmul.f32 %v1212, %v1229
      %v1234 = vmul.f32 %v1214, %v1230
      %v1235 = vpack.c.bf16 %v1232, %v1231
      %v1236 = vpack.c.bf16 %v1234, %v1233
      %1237 = vrot.lane.b32.xlu0 %v591, 40
      %v1238 = vpop.permute.xlu0 %1237
      %1239 = vrot.lane.b32.xlu0 %v592, 40
      %v1240 = vpop.permute.xlu0 %1239
      %v1244 = vsel %vm438, %v1235, 0
      %v1247 = vsel %vm438, %v1236, 0
      %1249 = vmatprep.subr.bf16.mxu0 0
      %1250 = vmatpush1.bf16.msra.mxu0 0
      %1251 = vmatprep.subr.bf16.mxu0 0
      %1252 = vmatpush1.bf16.msra.mxu0 0
      %1253 = vmatprep.subr.bf16.mxu0 0
      %1254 = vmatpush1.bf16.msra.mxu0 0
      %1255 = vmatprep.subr.bf16.mxu0 0
      %1256 = vmatpush1.bf16.msra.mxu0 0
      %1257 = vmatprep.subr.bf16.mxu0 0
      %1258 = vmatpush1.bf16.msra.mxu0 0
      %1259 = vmatprep.subr.bf16.mxu0 0
      %1260 = vmatpush1.bf16.msra.mxu0 0
      %1261 = vmatprep.subr.bf16.mxu0 0
      %1262 = vmatpush1.bf16.msra.mxu0 %v1240
      %1263 = vmatprep.subr.bf16.mxu0 0
      %1264 = vmatpush1.bf16.msra.mxu0 %v1238
      %1265 = vmatprep.subr.bf16.mxu0 0
      %1266 = vmatpush2.bf16.msra.mxu0 0
      %1267 = vmatprep.subr.bf16.mxu0 0
      %1268 = vmatpush2.bf16.msra.mxu0 0
      %1269 = vmatprep.subr.bf16.mxu0 0
      %1270 = vmatpush2.bf16.msra.mxu0 0
      %1271 = vmatprep.subr.bf16.mxu0 0
      %1272 = vmatpush2.bf16.msra.mxu0 0
      %1273 = vmatprep.subr.bf16.mxu0 0
      %1274 = vmatpush2.bf16.msra.mxu0 0
      %1275 = vmatprep.subr.bf16.mxu0 0
      %1276 = vmatpush2.bf16.msra.mxu0 0
      %1277 = vmatprep.subr.bf16.mxu0 0
      %1278 = vmatpush2.bf16.msra.mxu0 0
      %1279 = vmatprep.subr.bf16.mxu0 0
      %1280 = vmatpush2.bf16.msra.mxu0 0
      %1281 = vmatprep.mubr.bf16.mxu0 0
      %1282 = vmatmul.mubr.bf16.gmra.mxu0 %v1244
      %v1283 = vpop.f32.mrf.mxu0
      %v1284 = vadd.f32 0.0, %v1283
      %v1285 = vpop.f32.mrf.mxu0
      %v1286 = vpop.f32.mrf.mxu0
      %v1287 = vadd.f32 0.0, %v1286
      %v1288 = vpop.f32.mrf.mxu0
      %1289 = vmatprep.mubr.bf16.mxu0 0
      %1290 = vmatmul.mubr.bf16.gmra.mxu0 %v1247
      %v1291 = vpop.f32.mrf.mxu0
      %v1292 = vadd.f32 0.0, %v1291
      %v1293 = vpop.f32.mrf.mxu0
      %v1294 = vpop.f32.mrf.mxu0
      %v1295 = vadd.f32 0.0, %v1294
      %v1296 = vpop.f32.mrf.mxu0
      %1297 = vdwg.mxu0
      %1302 = vrot.lane.b32.xlu0 %v932, 8
      %v1303 = vpop.permute.xlu0 %1302
      %1304 = vrot.lane.b32.xlu0 %v935, 8
      %v1305 = vpop.permute.xlu0 %1304
      %1306 = vrot.lane.b32.xlu0 %v940, 8
      %v1307 = vpop.permute.xlu0 %1306
      %1308 = vrot.lane.b32.xlu0 %v943, 8
      %v1309 = vpop.permute.xlu0 %1308
      %1318 = vrot.lane.b32.xlu0 %v1108, 16
      %v1319 = vpop.permute.xlu0 %1318
      %1320 = vrot.lane.b32.xlu0 %v1111, 16
      %v1321 = vpop.permute.xlu0 %1320
      %1322 = vrot.lane.b32.xlu0 %v1116, 16
      %v1323 = vpop.permute.xlu0 %1322
      %1324 = vrot.lane.b32.xlu0 %v1119, 16
      %v1325 = vpop.permute.xlu0 %1324
      %1334 = vrot.lane.b32.xlu0 %v1284, 24
      %v1335 = vpop.permute.xlu0 %1334
      %1336 = vrot.lane.b32.xlu0 %v1287, 24
      %v1337 = vpop.permute.xlu0 %1336
      %1338 = vrot.lane.b32.xlu0 %v1292, 24
      %v1339 = vpop.permute.xlu0 %1338
      %1340 = vrot.lane.b32.xlu0 %v1295, 24
      %v1341 = vpop.permute.xlu0 %1340
      %v1346 = vsel %vm599, %v754, %v1303
      %v1347 = vsel %vm599, %v757, %v1305
      %v1348 = vsel %vm599, %v762, %v1307
      %v1349 = vsel %vm599, %v765, %v1309
      %vm1350 = vcmask 130048
      %v1351 = vsel %vm1350, %v1346, %v1319
      %v1352 = vsel %vm1350, %v1347, %v1321
      %v1353 = vsel %vm1350, %v1348, %v1323
      %v1354 = vsel %vm1350, %v1349, %v1325
      %vm1355 = vcmask 195584
      %v1356 = vsel %vm1355, %v1351, %v1335
      %v1357 = vsel %vm1355, %v1352, %v1337
      %v1358 = vsel %vm1355, %v1353, %v1339
      %v1359 = vsel %vm1355, %v1354, %v1341
      %v1360 = vpack.c.bf16 %v1357, %v1356
      %v1361 = vpack.c.bf16 %v1359, %v1358
      %v1362 = vld [vmem:[%s5] sm:$0xf]
      %v1363 = vld [vmem:[%s5 + $0x4] sm:$0xf]
      %v1364 = vld [vmem:[%s5 + $0x8] sm:$0xf]
      %v1365 = vld [vmem:[%s5 + $0xc] sm:$0xf]
      %v1366 = vlaneseq
      %v1367 = vshrl.u32 %v1366, 7
      %v1368 = vsub.s32 0, %v1367
      %v1369 = vrot.slane %v311, %v1368
      %v1374 = vunpack.c.l.b16 %v1362
      %v1375 = vunpack.c.l.b16 %v1363
      %v1376 = vunpack.c.l.b16 %v1364
      %v1377 = vunpack.c.l.b16 %v1365
      %v1378 = vpack.c.b16 %v1375, %v1374
      %v1379 = vpack.c.b16 %v1377, %v1376
      %v1383 = vsel %vm438, %v1360, 0
      %v1386 = vsel %vm438, %v1361, 0
      %1388 = vmatprep.subr.bf16.mxu0 0
      %1389 = vmatpush1.bf16.msra.mxu0 0
      %1390 = vmatprep.subr.bf16.mxu0 0
      %1391 = vmatpush1.bf16.msra.mxu0 0
      %1392 = vmatprep.subr.bf16.mxu0 0
      %1393 = vmatpush1.bf16.msra.mxu0 0
      %1394 = vmatprep.subr.bf16.mxu0 0
      %1395 = vmatpush1.bf16.msra.mxu0 0
      %1396 = vmatprep.subr.bf16.mxu0 0
      %1397 = vmatpush1.bf16.msra.mxu0 0
      %1398 = vmatprep.subr.bf16.mxu0 0
      %1399 = vmatpush1.bf16.msra.mxu0 0
      %1400 = vmatprep.subr.bf16.mxu0 0
      %1401 = vmatpush1.bf16.msra.mxu0 %v1379
      %1402 = vmatprep.subr.bf16.mxu0 0
      %1403 = vmatpush1.bf16.msra.mxu0 %v1378
      %1404 = vmatprep.subr.bf16.mxu0 0
      %1405 = vmatpush2.bf16.msra.mxu0 0
      %1406 = vmatprep.subr.bf16.mxu0 0
      %1407 = vmatpush2.bf16.msra.mxu0 0
      %1408 = vmatprep.subr.bf16.mxu0 0
      %1409 = vmatpush2.bf16.msra.mxu0 0
      %1410 = vmatprep.subr.bf16.mxu0 0
      %1411 = vmatpush2.bf16.msra.mxu0 0
      %1412 = vmatprep.subr.bf16.mxu0 0
      %1413 = vmatpush2.bf16.msra.mxu0 0
      %1414 = vmatprep.subr.bf16.mxu0 0
      %1415 = vmatpush2.bf16.msra.mxu0 0
      %1416 = vmatprep.subr.bf16.mxu0 0
      %1417 = vmatpush2.bf16.msra.mxu0 0
      %1418 = vmatprep.subr.bf16.mxu0 0
      %1419 = vmatpush2.bf16.msra.mxu0 0
      %1420 = vmatprep.mubr.bf16.mxu0 0
      %1421 = vmatmul.mubr.bf16.gmra.mxu0 %v1383
      %v1422 = vpop.f32.mrf.mxu0
      %v1423 = vadd.f32 %v1369, %v1422
      %v1424 = vpop.f32.mrf.mxu0
      %v1425 = vpop.f32.mrf.mxu0
      %v1426 = vadd.f32 %v1369, %v1425
      %v1427 = vpop.f32.mrf.mxu0
      %1428 = vmatprep.mubr.bf16.mxu0 0
      %1429 = vmatmul.mubr.bf16.gmra.mxu0 %v1386
      %v1430 = vpop.f32.mrf.mxu0
      %v1431 = vadd.f32 %v1369, %v1430
      %v1432 = vpop.f32.mrf.mxu0
      %v1433 = vpop.f32.mrf.mxu0
      %v1434 = vadd.f32 %v1369, %v1433
      %v1435 = vpop.f32.mrf.mxu0
      %1436 = vdwg.mxu0
      %v1437 = vadd.f32 %v1423, %v434
      %v1438 = vadd.f32 %v1426, %v435
      %v1439 = vadd.f32 %v1431, %v436
      %v1440 = vadd.f32 %v1434, %v437
      %v1441 = vsel %vm438, %v1437, 0.0
      %1442 = vadd.xlane.f32.xlu0 %v1441
      %v1443 = vpop.xlane.xlu0 %1442
      %v1444 = vsel %vm438, %v1438, 0.0
      %1445 = vadd.xlane.f32.xlu0 %v1444
      %v1446 = vpop.xlane.xlu0 %1445
      %v1447 = vsel %vm438, %v1439, 0.0
      %1448 = vadd.xlane.f32.xlu0 %v1447
      %v1449 = vpop.xlane.xlu0 %1448
      %v1450 = vsel %vm438, %v1440, 0.0
      %1451 = vadd.xlane.f32.xlu0 %v1450
      %v1452 = vpop.xlane.xlu0 %1451
      %v1453 = vmul.f32 %v1443, %v451
      %v1454 = vmul.f32 %v1446, %v451
      %v1455 = vmul.f32 %v1449, %v451
      %v1456 = vmul.f32 %v1452, %v451
      %v1457 = vsub.f32 %v1437, %v1453
      %v1458 = vsub.f32 %v1438, %v1454
      %v1459 = vsub.f32 %v1439, %v1455
      %v1460 = vsub.f32 %v1440, %v1456
      %v1461 = vmul.f32 %v1457, %v1457
      %v1462 = vmul.f32 %v1458, %v1458
      %v1463 = vmul.f32 %v1459, %v1459
      %v1464 = vmul.f32 %v1460, %v1460
      %v1465 = vsel %vm438, %v1461, 0.0
      %1466 = vadd.xlane.f32.xlu0 %v1465
      %v1467 = vpop.xlane.xlu0 %1466
      %v1468 = vsel %vm438, %v1462, 0.0
      %1469 = vadd.xlane.f32.xlu0 %v1468
      %v1470 = vpop.xlane.xlu0 %1469
      %v1471 = vsel %vm438, %v1463, 0.0
      %1472 = vadd.xlane.f32.xlu0 %v1471
      %v1473 = vpop.xlane.xlu0 %1472
      %v1474 = vsel %vm438, %v1464, 0.0
      %1475 = vadd.xlane.f32.xlu0 %v1474
      %v1476 = vpop.xlane.xlu0 %1475
      %v1477 = vmul.f32 %v1467, %v451
      %v1478 = vmul.f32 %v1470, %v451
      %v1479 = vmul.f32 %v1473, %v451
      %v1480 = vmul.f32 %v1476, %v451
      %v1481 = vadd.f32 %v1477, 1e-05
      %v1482 = vadd.f32 %v1478, 1e-05
      %v1483 = vadd.f32 %v1479, 1e-05
      %v1484 = vadd.f32 %v1480, 1e-05
      %v1485 = vrsqrt.pop %v1481
      %v1486 = vrsqrt.pop %v1482
      %v1487 = vrsqrt.pop %v1483
      %v1488 = vrsqrt.pop %v1484
      %v1489 = vmul.f32 %v1457, %v1485
      %v1490 = vmul.f32 %v1458, %v1486
      %v1491 = vmul.f32 %v1459, %v1487
      %v1492 = vmul.f32 %v1460, %v1488
      %v1493 = vlaneseq
      %v1494 = vshrl.u32 %v1493, 7
      %v1495 = vsub.s32 0, %v1494
      %v1496 = vrot.slane %v312, %v1495
      %v1497 = vmul.f32 %v1489, %v1496
      %v1498 = vmul.f32 %v1490, %v1496
      %v1499 = vmul.f32 %v1491, %v1496
      %v1500 = vmul.f32 %v1492, %v1496
      %v1501 = vlaneseq
      %v1502 = vshrl.u32 %v1501, 7
      %v1503 = vsub.s32 0, %v1502
      %v1504 = vrot.slane %v313, %v1503
      %v1505 = vadd.f32 %v1497, %v1504
      %v1506 = vadd.f32 %v1498, %v1504
      %v1507 = vadd.f32 %v1499, %v1504
      %v1508 = vadd.f32 %v1500, %v1504
      %v1509 = vpack.c.bf16 %v1506, %v1505
      %v1510 = vpack.c.bf16 %v1508, %v1507
      %v1511 = vld [vmem:[%s6] sm:$0xf]
      %v1512 = vld [vmem:[%s6 + $0x4] sm:$0xf]
      %v1513 = vld [vmem:[%s6 + $0x8] sm:$0xf]
      %v1514 = vld [vmem:[%s6 + $0xc] sm:$0xf]
      %v1515 = vlaneseq
      %v1516 = vshrl.u32 %v1515, 7
      %v1517 = vsub.s32 0, %v1516
      %v1518 = vrot.slane %v314, %v1517
      %v1523 = vunpack.c.l.b16 %v1511
      %v1524 = vunpack.c.l.b16 %v1512
      %v1525 = vunpack.c.l.b16 %v1513
      %v1526 = vunpack.c.l.b16 %v1514
      %v1527 = vpack.c.b16 %v1524, %v1523
      %v1528 = vpack.c.b16 %v1526, %v1525
      %v1532 = vsel %vm438, %v1509, 0
      %v1535 = vsel %vm438, %v1510, 0
      %1537 = vmatprep.subr.bf16.mxu0 0
      %1538 = vmatpush1.bf16.msra.mxu0 0
      %1539 = vmatprep.subr.bf16.mxu0 0
      %1540 = vmatpush1.bf16.msra.mxu0 0
      %1541 = vmatprep.subr.bf16.mxu0 0
      %1542 = vmatpush1.bf16.msra.mxu0 0
      %1543 = vmatprep.subr.bf16.mxu0 0
      %1544 = vmatpush1.bf16.msra.mxu0 0
      %1545 = vmatprep.subr.bf16.mxu0 0
      %1546 = vmatpush1.bf16.msra.mxu0 0
      %1547 = vmatprep.subr.bf16.mxu0 0
      %1548 = vmatpush1.bf16.msra.mxu0 0
      %1549 = vmatprep.subr.bf16.mxu0 0
      %1550 = vmatpush1.bf16.msra.mxu0 %v1528
      %1551 = vmatprep.subr.bf16.mxu0 0
      %1552 = vmatpush1.bf16.msra.mxu0 %v1527
      %1553 = vmatprep.subr.bf16.mxu0 0
      %1554 = vmatpush2.bf16.msra.mxu0 0
      %1555 = vmatprep.subr.bf16.mxu0 0
      %1556 = vmatpush2.bf16.msra.mxu0 0
      %1557 = vmatprep.subr.bf16.mxu0 0
      %1558 = vmatpush2.bf16.msra.mxu0 0
      %1559 = vmatprep.subr.bf16.mxu0 0
      %1560 = vmatpush2.bf16.msra.mxu0 0
      %1561 = vmatprep.subr.bf16.mxu0 0
      %1562 = vmatpush2.bf16.msra.mxu0 0
      %1563 = vmatprep.subr.bf16.mxu0 0
      %1564 = vmatpush2.bf16.msra.mxu0 0
      %1565 = vmatprep.subr.bf16.mxu0 0
      %1566 = vmatpush2.bf16.msra.mxu0 0
      %1567 = vmatprep.subr.bf16.mxu0 0
      %1568 = vmatpush2.bf16.msra.mxu0 0
      %1569 = vmatprep.mubr.bf16.mxu0 0
      %1570 = vmatmul.mubr.bf16.gmra.mxu0 %v1532
      %v1571 = vpop.f32.mrf.mxu0
      %v1572 = vadd.f32 %v1518, %v1571
      %v1573 = vpop.f32.mrf.mxu0
      %v1574 = vpop.f32.mrf.mxu0
      %v1575 = vadd.f32 %v1518, %v1574
      %v1576 = vpop.f32.mrf.mxu0
      %1577 = vmatprep.mubr.bf16.mxu0 0
      %1578 = vmatmul.mubr.bf16.gmra.mxu0 %v1535
      %v1579 = vpop.f32.mrf.mxu0
      %v1580 = vadd.f32 %v1518, %v1579
      %v1581 = vpop.f32.mrf.mxu0
      %v1582 = vpop.f32.mrf.mxu0
      %v1583 = vadd.f32 %v1518, %v1582
      %v1584 = vpop.f32.mrf.mxu0
      %1585 = vdwg.mxu0
      %v1586 = vmax.f32 %v1572, 0.0
      %v1587 = vmax.f32 %v1575, 0.0
      %v1588 = vmax.f32 %v1580, 0.0
      %v1589 = vmax.f32 %v1583, 0.0
      %v1590 = vpack.c.bf16 %v1587, %v1586
      %v1591 = vpack.c.bf16 %v1589, %v1588
      %v1592 = vld [vmem:[%s7] sm:$0xf]
      %v1593 = vld [vmem:[%s7 + $0x4] sm:$0xf]
      %v1594 = vld [vmem:[%s7 + $0x8] sm:$0xf]
      %v1595 = vld [vmem:[%s7 + $0xc] sm:$0xf]
      %v1596 = vld [vmem:[%s7 + $0x10] sm:$0xf]
      %v1597 = vld [vmem:[%s7 + $0x14] sm:$0xf]
      %v1598 = vld [vmem:[%s7 + $0x18] sm:$0xf]
      %v1599 = vld [vmem:[%s7 + $0x1c] sm:$0xf]
      %v1600 = vld [vmem:[%s7 + $0x20] sm:$0xf]
      %v1601 = vld [vmem:[%s7 + $0x24] sm:$0xf]
      %v1602 = vld [vmem:[%s7 + $0x28] sm:$0xf]
      %v1603 = vld [vmem:[%s7 + $0x2c] sm:$0xf]
      %v1604 = vld [vmem:[%s7 + $0x30] sm:$0xf]
      %v1605 = vld [vmem:[%s7 + $0x34] sm:$0xf]
      %v1606 = vld [vmem:[%s7 + $0x38] sm:$0xf]
      %v1607 = vld [vmem:[%s7 + $0x3c] sm:$0xf]
      %v1608 = vlaneseq
      %v1609 = vshrl.u32 %v1608, 7
      %v1610 = vsub.s32 0, %v1609
      %v1611 = vrot.slane %v315, %v1610
      %v1628 = vunpack.c.l.b16 %v1592
      %v1629 = vunpack.c.l.b16 %v1593
      %v1630 = vunpack.c.l.b16 %v1594
      %v1631 = vunpack.c.l.b16 %v1595
      %v1632 = vunpack.c.l.b16 %v1596
      %v1633 = vunpack.c.l.b16 %v1597
      %v1634 = vunpack.c.l.b16 %v1598
      %v1635 = vunpack.c.l.b16 %v1599
      %v1636 = vunpack.c.l.b16 %v1600
      %v1637 = vunpack.c.l.b16 %v1601
      %v1638 = vunpack.c.l.b16 %v1602
      %v1639 = vunpack.c.l.b16 %v1603
      %v1640 = vunpack.c.l.b16 %v1604
      %v1641 = vunpack.c.l.b16 %v1605
      %v1642 = vunpack.c.l.b16 %v1606
      %v1643 = vunpack.c.l.b16 %v1607
      %v1644 = vpack.c.b16 %v1629, %v1628
      %v1645 = vpack.c.b16 %v1631, %v1630
      %v1646 = vpack.c.b16 %v1633, %v1632
      %v1647 = vpack.c.b16 %v1635, %v1634
      %v1648 = vpack.c.b16 %v1637, %v1636
      %v1649 = vpack.c.b16 %v1639, %v1638
      %v1650 = vpack.c.b16 %v1641, %v1640
      %v1651 = vpack.c.b16 %v1643, %v1642
      %1660 = vmatprep.subr.bf16.mxu0 0
      %1661 = vmatpush1.bf16.msra.mxu0 %v1651
      %1662 = vmatprep.subr.bf16.mxu0 0
      %1663 = vmatpush1.bf16.msra.mxu0 %v1650
      %1664 = vmatprep.subr.bf16.mxu0 0
      %1665 = vmatpush1.bf16.msra.mxu0 %v1649
      %1666 = vmatprep.subr.bf16.mxu0 0
      %1667 = vmatpush1.bf16.msra.mxu0 %v1648
      %1668 = vmatprep.subr.bf16.mxu0 0
      %1669 = vmatpush1.bf16.msra.mxu0 %v1647
      %1670 = vmatprep.subr.bf16.mxu0 0
      %1671 = vmatpush1.bf16.msra.mxu0 %v1646
      %1672 = vmatprep.subr.bf16.mxu0 0
      %1673 = vmatpush1.bf16.msra.mxu0 %v1645
      %1674 = vmatprep.subr.bf16.mxu0 0
      %1675 = vmatpush1.bf16.msra.mxu0 %v1644
      %1676 = vmatprep.subr.bf16.mxu0 0
      %1677 = vmatpush2.bf16.msra.mxu0 0
      %1678 = vmatprep.subr.bf16.mxu0 0
      %1679 = vmatpush2.bf16.msra.mxu0 0
      %1680 = vmatprep.subr.bf16.mxu0 0
      %1681 = vmatpush2.bf16.msra.mxu0 0
      %1682 = vmatprep.subr.bf16.mxu0 0
      %1683 = vmatpush2.bf16.msra.mxu0 0
      %1684 = vmatprep.subr.bf16.mxu0 0
      %1685 = vmatpush2.bf16.msra.mxu0 0
      %1686 = vmatprep.subr.bf16.mxu0 0
      %1687 = vmatpush2.bf16.msra.mxu0 0
      %1688 = vmatprep.subr.bf16.mxu0 0
      %1689 = vmatpush2.bf16.msra.mxu0 0
      %1690 = vmatprep.subr.bf16.mxu0 0
      %1691 = vmatpush2.bf16.msra.mxu0 0
      %1692 = vmatprep.mubr.bf16.mxu0 0
      %1693 = vmatmul.mubr.bf16.gmra.mxu0 %v1590
      %v1694 = vpop.f32.mrf.mxu0
      %v1695 = vadd.f32 %v1611, %v1694
      %v1696 = vpop.f32.mrf.mxu0
      %v1697 = vpop.f32.mrf.mxu0
      %v1698 = vadd.f32 %v1611, %v1697
      %v1699 = vpop.f32.mrf.mxu0
      %1700 = vmatprep.mubr.bf16.mxu0 0
      %1701 = vmatmul.mubr.bf16.gmra.mxu0 %v1591
      %v1702 = vpop.f32.mrf.mxu0
      %v1703 = vadd.f32 %v1611, %v1702
      %v1704 = vpop.f32.mrf.mxu0
      %v1705 = vpop.f32.mrf.mxu0
      %v1706 = vadd.f32 %v1611, %v1705
      %v1707 = vpop.f32.mrf.mxu0
      %1708 = vdwg.mxu0
      %v1709 = vadd.f32 %v1695, %v1437
      %v1710 = vadd.f32 %v1698, %v1438
      %v1711 = vadd.f32 %v1703, %v1439
      %v1712 = vadd.f32 %v1706, %v1440
      %1713 = vst.msk [vmem:[%s305] sm:$0xff] %vm438, %v1709
      %1714 = vst.msk [vmem:[%s305 + $0x8] sm:$0xff] %vm438, %v1710
      %1715 = vst.msk [vmem:[%s305 + $0x10] sm:$0xff] %vm438, %v1711
      %1716 = vst.msk [vmem:[%s305 + $0x18] sm:$0xff] %vm438, %v1712
      %p1717 = scmp.lt.s32.totalorder %s19, 1
      %s1718 = scalar_select %p1717, %s19, 1
      %s1719 = smul.addr %s1718, 4
      %s1720 = smul.addr %s1719, 8
      %s1721 = scalar_lea.vmem %s8, %s1720
      // Predicated region
      $region53: #{transgan_forward.1} parent=51 // pred_check
        %p1722 = pneg %p210
      $region54: #{transgan_forward.1} parent=51 // pred_check_branch
        %1724 = sbr.rel (%p1722) target = $region56
      $region55: #{transgan_forward.1} parent=51 // pred_region
        _
      $region56: #{transgan_forward.1} parent=51 // pred_fallthru
        _
    $region52: #{transgan_forward.1} parent=5 // pred_fallthru
      _
    %p1725 = scmp.le.s32.totalorder 2, %s14
    // Predicated region
    $region57: #{transgan_forward.1} parent=5 // pred_check
      %p1726 = pneg %p1725
    $region58: #{transgan_forward.1} parent=5 // pred_check_branch
      %1728 = sbr.rel (%p1726) target = $region60
    $region59: #{transgan_forward.1} parent=5 // pred_region
      %s1729 = ssub.s32 %s14, 2
      // Predicated region
      $region61: #{transgan_forward.1} parent=59 // pred_check
        %p1730 = pneg %p216
      $region62: #{transgan_forward.1} parent=59 // pred_check_branch
        %1732 = sbr.rel (%p1730) target = $region64
      $region63: #{transgan_forward.1} parent=59 // pred_region
        %p1733 = scmp.lt.s32.totalorder %s20, 1
        %s1734 = scalar_select %p1733, %s20, 1
        %s1735 = smul.addr %s1734, 4
        %s1736 = smul.addr %s1735, 8
        %s1737 = scalar_lea.vmem %s8, %s1736
      $region64: #{transgan_forward.1} parent=59 // pred_fallthru
        _
    $region60: #{transgan_forward.1} parent=5 // pred_fallthru
      _
  $region6: #{transgan_forward.1} parent=0 // loop_footer
    %s18 = sadd.s32 1, %s14
  $region7: #{transgan_forward.1} parent=0 // loop_footer_branch
    %13 = sbr.rel target = $region3
  $region8: #{transgan_forward.1} parent=0 // loop_exit
    _

</llo_original>
